<compile_context>
chip_gen: v7x
topology: tpu7x:2x2x1
jax: 0.10.0
libtpu: 0.0.40
codegen_flags: <defaults>
</compile_context>

<pallas_src>
import functools

import numpy as np
import jax
import jax.numpy as jnp
from jax.experimental import pallas as pl
from jax.experimental.pallas import tpu as pltpu


C1, C2 = 16, 32   # encoder channel widths (small synthetic config)
NDIM = 2          # 2-D displacement field
CPS = 4           # control-point spacing of the B-spline FFD (1/4 resolution)
NEG_SLOPE = 0.2


def _round_up(x, m):
    return (x + m - 1) // m * m


def _vmem_limit_bytes(need_bytes):
    """Generation-aware scoped-VMEM budget with headroom."""
    cap = 48 * 1024 * 1024                       # safe on v7x (64 MiB physical)
    try:
        kind = jax.devices()[0].device_kind.lower()
        if any(t in kind for t in ("v4", "v5", "v6")):
            cap = 96 * 1024 * 1024               # 128-MiB-VMEM parts
    except Exception:
        pass
    return int(min(cap, max(32 * 1024 * 1024, 2 * int(need_bytes) + (4 << 20))))


# ----------------------------------------------------------------------------
# Pallas kernel 1: fused 2-D conv (tap accumulation on a flattened spatial dim)
#   out[co, p] = bias[co] + sum_t  w_taps[t, co, :] @ x_flat[:, p + off_t]
# Grid is over batch; the whole padded image for one batch element lives in
# VMEM so every tap is a contiguous (Cin, Lout) slice -> one MXU matmul / tap.
# ----------------------------------------------------------------------------
def _fused_conv_kernel(w_ref, x_ref, b_ref, o_ref, *, offsets, negative_slope):
    cout = o_ref.shape[1]
    lout = o_ref.shape[2]
    acc = jnp.zeros((cout, lout), jnp.float32)
    for t, off in enumerate(offsets):                        # unrolled, T<=9
        x_t = x_ref[0, :, off:off + lout]                    # (Cin, Lout) bf16
        acc = acc + jnp.dot(w_ref[t], x_t,
                            preferred_element_type=jnp.float32)
    acc = acc + b_ref[...]                                   # (Cout, 1) bias
    if negative_slope is not None:
        acc = jnp.where(acc >= 0.0, acc, acc * negative_slope)
    o_ref[0, :, :] = acc.astype(o_ref.dtype)


def fused_conv_flat(x_flat, w_taps, bias, offsets, lout, negative_slope,
                    out_dtype=jnp.bfloat16):
    """x_flat: (B, Cin, Lp), w_taps: (T, Cout, Cin), bias: (Cout,).
    Returns (B, Cout, lout); caller reshapes / strips garbage columns."""
    Bn, Cin, Lp = x_flat.shape
    T, Cout, Cin2 = w_taps.shape
    assert Cin == Cin2, (x_flat.shape, w_taps.shape)

    kernel = functools.partial(_fused_conv_kernel,
                               offsets=tuple(int(o) for o in offsets),
                               negative_slope=negative_slope)

    in_b = Cin * Lp * x_flat.dtype.itemsize
    out_b = Cout * lout * np.dtype(out_dtype).itemsize
    w_b = int(w_taps.size) * w_taps.dtype.itemsize
    need = 2 * (in_b + out_b) + w_b + Cout * lout * 4 + Cout * 4

    flops = 2 * Bn * T * Cout * Cin * lout
    bytes_accessed = (int(x_flat.size) * x_flat.dtype.itemsize + w_b
                      + Cout * 4 + Bn * out_b)

    out = pl.pallas_call(
        kernel,
        out_shape=jax.ShapeDtypeStruct((Bn, Cout, lout), out_dtype),
        grid=(Bn,),
        in_specs=[
            pl.BlockSpec((T, Cout, Cin), lambda b: (0, 0, 0)),   # tap weights
            pl.BlockSpec((1, Cin, Lp), lambda b: (b, 0, 0)),     # one batch img
            pl.BlockSpec((Cout, 1), lambda b: (0, 0)),           # bias
        ],
        out_specs=pl.BlockSpec((1, Cout, lout), lambda b: (b, 0, 0)),
        compiler_params=pltpu.CompilerParams(
            dimension_semantics=("parallel",),                   # megacore/2 TC
            vmem_limit_bytes=_vmem_limit_bytes(need)),
        cost_estimate=pl.CostEstimate(flops=int(flops), transcendentals=0,
                                      bytes_accessed=int(bytes_accessed)),
    )(w_taps, x_flat, bias.reshape(Cout, 1).astype(jnp.float32))
    return out


# ----------------------------------------------------------------------------
# Pallas kernel 2: row-tiled matmul  out (M, N) = x (M, K) @ w (K, N)
# Big batched dim M is the tiled/pipelined grid axis, lanes carry N (dense).
# Used for both separable B-spline FFD passes.
# ----------------------------------------------------------------------------
def _rowmm_kernel(x_ref, w_ref, o_ref):
    o_ref[...] = jnp.dot(x_ref[...], w_ref[...],
                         preferred_element_type=jnp.float32).astype(o_ref.dtype)


def rowmm(x, w, out_dtype=jnp.float32, tile_rows=512):
    M, K = x.shape
    K2, N = w.shape
    assert K == K2, (x.shape, w.shape)

    if M <= 8:
        tm = M
    else:
        # multiple of 8, and >= 2 grid steps so both TCs of a v7x get work
        tm = min(int(tile_rows), _round_up(pl.cdiv(M, 2), 8))
    grid_m = pl.cdiv(M, tm)

    need = 2 * (tm * K * x.dtype.itemsize
                + tm * N * np.dtype(out_dtype).itemsize) + K * N * w.dtype.itemsize
    flops = 2 * M * K * N
    bytes_accessed = (int(x.size) * x.dtype.itemsize
                      + int(w.size) * w.dtype.itemsize
                      + M * N * np.dtype(out_dtype).itemsize)

    return pl.pallas_call(
        _rowmm_kernel,
        out_shape=jax.ShapeDtypeStruct((M, N), out_dtype),
        grid=(grid_m,),
        in_specs=[
            pl.BlockSpec((tm, K), lambda i: (i, 0)),
            pl.BlockSpec((K, N), lambda i: (0, 0)),
        ],
        out_specs=pl.BlockSpec((tm, N), lambda i: (i, 0)),
        compiler_params=pltpu.CompilerParams(
            dimension_semantics=("parallel",),
            vmem_limit_bytes=_vmem_limit_bytes(need)),
        cost_estimate=pl.CostEstimate(flops=int(flops), transcendentals=0,
                                      bytes_accessed=int(bytes_accessed)),
    )(x, w)


# ----------------------------------------------------------------------------
# XLA glue: padding, space-to-depth, tap-weight layout, B-spline bases
# ----------------------------------------------------------------------------
def _space_to_depth(xp):
    """(B, C, 2Hq, 2Wq) -> (B, 4C, Hq, Wq); channel order (pi, pj, c)."""
    Bn, C, Hp, Wp = xp.shape
    Hq, Wq = Hp // 2, Wp // 2
    x = xp.reshape(Bn, C, Hq, 2, Wq, 2)          # [b, c, i, pi, j, pj]
    x = jnp.transpose(x, (0, 3, 5, 1, 2, 4))     # [b, pi, pj, c, i, j]
    return x.reshape(Bn, 4 * C, Hq, Wq)


def _s2d_tap_weights(w):
    """(Cout, Cin, 3, 3) -> (4, Cout, 4*Cin) tap matrices for the 2x2 conv on
    the space-to-depth'd input.  Tap order (a, b); phase order (pi, pj, c)."""
    Cout, Cin = w.shape[0], w.shape[1]
    w4 = jnp.zeros((2, 2, Cout, 2, 2, Cin), w.dtype)   # [a, b, o, pi, pj, c]
    for a in range(2):
        for bb in range(2):
            for pi in range(2):
                for pj in range(2):
                    di, dj = 2 * a + pi, 2 * bb + pj
                    if di < 3 and dj < 3:
                        w4 = w4.at[a, bb, :, pi, pj, :].set(w[:, :, di, dj])
    return w4.reshape(4, Cout, 4 * Cin)


def _conv3x3_s2(x, w, b, negative_slope):
    """3x3, stride-2, pad-1 conv (NCHW, even H/W) via space-to-depth + fused
    Pallas tap-accumulation kernel.  Returns (B, Cout, H/2, W/2) bf16."""
    Bn, C, H, W = x.shape
    Ho, Wo = H // 2, W // 2
    Hq, Wq = Ho + 1, Wo + 1
    xp = jnp.pad(x, ((0, 0), (0, 0), (1, 1), (1, 1)))
    xs = _space_to_depth(xp)                                     # (B, 4C, Hq, Wq)
    offsets = [a * Wq + bb for a in (0, 1) for bb in (0, 1)]
    lout = Ho * Wq
    lp_needed = lout + max(offsets)
    x_flat = xs.reshape(Bn, 4 * C, Hq * Wq)
    if lp_needed > Hq * Wq:
        x_flat = jnp.pad(x_flat, ((0, 0), (0, 0), (0, lp_needed - Hq * Wq)))
    w_taps = _s2d_tap_weights(w)                                 # (4, Cout, 4C)
    out = fused_conv_flat(x_flat, w_taps, b, offsets, lout, negative_slope,
                          out_dtype=jnp.bfloat16)
    return out.reshape(Bn, -1, Ho, Wq)[:, :, :, :Wo]


def _conv3x3_s1(x, w, b, negative_slope, out_dtype=jnp.bfloat16):
    """3x3, stride-1, pad-1 conv (NCHW) via the fused Pallas tap kernel."""
    Bn, C, H, W = x.shape
    Hp, Wp = H + 2, W + 2
    xp = jnp.pad(x, ((0, 0), (0, 0), (1, 1), (1, 1)))
    offsets = [di * Wp + dj for di in range(3) for dj in range(3)]
    lout = H * Wp
    lp_needed = lout + max(offsets)
    x_flat = xp.reshape(Bn, C, Hp * Wp)
    if lp_needed > Hp * Wp:
        x_flat = jnp.pad(x_flat, ((0, 0), (0, 0), (0, lp_needed - Hp * Wp)))
    w_taps = jnp.transpose(w, (2, 3, 0, 1)).reshape(9, w.shape[0], C)
    out = fused_conv_flat(x_flat, w_taps, b, offsets, lout, negative_slope,
                          out_dtype=out_dtype)
    return out.reshape(Bn, -1, H, Wp)[:, :, :, :W]


def _cubic_bspline(t):
    t = np.abs(t)
    return np.where(t < 1.0, (4.0 - 6.0 * t ** 2 + 3.0 * t ** 3) / 6.0,
                    np.where(t < 2.0, (2.0 - t) ** 3 / 6.0, 0.0))


@functools.lru_cache(maxsize=None)
def _bspline_basis_np(out_size, cps):
    n_cp = out_size // cps
    i = np.arange(out_size)[:, None].astype(np.float64)
    p = np.arange(n_cp)[None, :].astype(np.float64)
    m = _cubic_bspline(i / cps - p)
    # Row-normalise so the partition of unity also holds at the image border
    # (no +3 border control points in this compact head).
    m = m / np.maximum(m.sum(axis=1, keepdims=True), 1e-8)
    return m.astype(np.float32)


@functools.lru_cache(maxsize=None)
def bspline_basis_T(out_size, cps):
    """(out//cps, out) cubic-B-spline basis, bf16 (columns sum to 1)."""
    return jnp.asarray(_bspline_basis_np(out_size, cps).T).astype(jnp.bfloat16)


# ----------------------------------------------------------------------------
# Model: parameters + forward
# ----------------------------------------------------------------------------
def init_params(key):
    k1, k2, k3 = jax.random.split(key, 3)

    def glorot(k, cout, cin):
        lim = np.sqrt(6.0 / (cin * 9 + cout))
        return jax.random.uniform(k, (cout, cin, 3, 3), jnp.float32, -lim, lim)

    return {
        "w1": glorot(k1, C1, 2).astype(jnp.bfloat16),
        "b1": jnp.zeros((C1,), jnp.float32),
        "w2": glorot(k2, C2, C1).astype(jnp.bfloat16),
        "b2": jnp.zeros((C2,), jnp.float32),
        "w_flow": (glorot(k3, NDIM, C2) * 0.1).astype(jnp.bfloat16),
        "b_flow": jnp.zeros((NDIM,), jnp.float32),
    }


def lapirn_forward(params, x, y=None, return_tuple=True):
    """Mirrors LapIRN's forward(moving, fixed) -> displacement.

    x, y: NCHW float32 (moving, fixed) with H, W multiples of 4.
    Returns (flow, disp) if return_tuple else disp; both (B, 2, H, W) f32.
    """
    if y is not None:
        x = jnp.concatenate([x, y], axis=1)                   # (B, 2, H, W)
    B, _, H, W = x.shape
    if H % 4 or W % 4:
        raise ValueError("H and W must be multiples of 4 (2x stride-2 + FFD).")
    x = x.astype(jnp.bfloat16)

    # Encoder (fused-tap Pallas convs, bf16 activations).
    h = _conv3x3_s2(x, params["w1"], params["b1"], NEG_SLOPE)   # (B,C1,H/2,W/2)
    h = _conv3x3_s2(h, params["w2"], params["b2"], NEG_SLOPE)   # (B,C2,H/4,W/4)
    cp = _conv3x3_s1(h, params["w_flow"], params["b_flow"], None,
                     out_dtype=jnp.bfloat16)                    # (B,2,Hc,Wc)
    Hc, Wc = cp.shape[2], cp.shape[3]

    BhT = bspline_basis_T(H, CPS)                               # (Hc, H) bf16
    BwT = bspline_basis_T(W, CPS)                               # (Wc, W) bf16

    # Separable cubic-B-spline FFD upsampling as two row-tiled matmuls.
    # Pass 1: rows = (b, d, w'), lanes = H (dense).
    x1 = jnp.transpose(cp, (0, 1, 3, 2)).reshape(B * NDIM * Wc, Hc)
    q = rowmm(x1, BhT, out_dtype=jnp.bfloat16)                  # (B*2*Wc, H)
    # Pass 2: rows = (b, d, h), lanes = W (dense) -> output is already NCHW.
    x2 = jnp.transpose(q.reshape(B, NDIM, Wc, H), (0, 1, 3, 2)).reshape(
        B * NDIM * H, Wc)
    flow = rowmm(x2, BwT, out_dtype=jnp.float32).reshape(B, NDIM, H, W)

    # TODO(synk): SVF scaling-and-squaring integration and the grid_sample
    # warps composing the LapIRN pyramid levels are data-dependent gathers
    # with no clean Pallas equivalent; non-SVF surrogate: disp == flow.
    disp = flow

    if return_tuple:
        return (flow, disp)
    return disp


# ----------------------------------------------------------------------------
if __name__ == "__main__":
    key = jax.random.PRNGKey(0)
    k_p, k_x, k_y = jax.random.split(key, 3)

    params = init_params(k_p)
    moving = jax.random.normal(k_x, (2, 1, 16, 16), dtype=jnp.float32)
    fixed = jax.random.normal(k_y, (2, 1, 16, 16), dtype=jnp.float32)

    fwd = jax.jit(functools.partial(lapirn_forward, return_tuple=True))
    flow, disp = fwd(params, moving, fixed)
    jax.block_until_ready((flow, disp))

    assert flow.shape == (2, 2, 16, 16) and disp.shape == (2, 2, 16, 16)
    assert flow.dtype == jnp.float32
    assert bool(jnp.all(jnp.isfinite(flow)))
    print("KERNEL_OK")
</pallas_src>

<mosaic_0001>
module attributes {stable_mosaic.version = 11 : i64} {
  func.func @_fused_conv_kernel(%arg0: i32, %arg1: memref<4x16x8xbf16, #tpu.memory_space<vmem>>, %arg2: memref<1x8x82xbf16, #tpu.memory_space<vmem>>, %arg3: memref<16x1xf32, #tpu.memory_space<vmem>>, %arg4: memref<1x16x72xbf16, #tpu.memory_space<vmem>>) attributes {dimension_semantics = [#tpu.dimension_semantics<parallel>], iteration_bounds = array<i64: 2>, scalar_prefetch = 0 : i64, scratch_operands = 0 : i64, tpu.core_type = #tpu.core_type<tc>, window_params = [{pipeline_mode = #tpu.pipeline_mode<synchronous>, transform_indices = @transform_0, window_bounds = array<i64: 4, 16, 8>}, {transform_indices = @transform_1, window_bounds = array<i64: 1, 8, 82>}, {pipeline_mode = #tpu.pipeline_mode<synchronous>, transform_indices = @transform_2, window_bounds = array<i64: 16, 1>}, {transform_indices = @transform_3, window_bounds = array<i64: 1, 16, 72>}]} {
    %cst = arith.constant 0.000000e+00 : f32
    %0 = vector.broadcast %cst : f32 to vector<16x72xf32>
    %c0 = arith.constant 0 : index
    %c0_0 = arith.constant 0 : index
    %c0_1 = arith.constant 0 : index
    %1 = vector.load %arg2[%c0, %c0_0, %c0_1] : memref<1x8x82xbf16, #tpu.memory_space<vmem>>, vector<1x8x72xbf16>
    %2 = vector.shape_cast %1 : vector<1x8x72xbf16> to vector<8x72xbf16>
    %c0_2 = arith.constant 0 : index
    %c0_3 = arith.constant 0 : index
    %c0_4 = arith.constant 0 : index
    %3 = vector.load %arg1[%c0_2, %c0_3, %c0_4] : memref<4x16x8xbf16, #tpu.memory_space<vmem>>, vector<1x16x8xbf16>
    %4 = vector.shape_cast %3 : vector<1x16x8xbf16> to vector<16x8xbf16>
    %cst_5 = arith.constant dense<0.000000e+00> : vector<16x72xf32>
    %5 = tpu.matmul %4, %2, %cst_5 {dimension_numbers = #tpu.dot_dimension_numbers<[1], [0], [0], [1], [0, 0, 1, 1], [], []>} : vector<16x8xbf16>, vector<8x72xbf16>, vector<16x72xf32> -> vector<16x72xf32>
    %6 = arith.addf %0, %5 : vector<16x72xf32>
    %c0_6 = arith.constant 0 : index
    %c0_7 = arith.constant 0 : index
    %c1 = arith.constant 1 : index
    %7 = vector.load %arg2[%c0_6, %c0_7, %c1] : memref<1x8x82xbf16, #tpu.memory_space<vmem>>, vector<1x8x72xbf16>
    %8 = vector.shape_cast %7 : vector<1x8x72xbf16> to vector<8x72xbf16>
    %c1_8 = arith.constant 1 : index
    %c0_9 = arith.constant 0 : index
    %c0_10 = arith.constant 0 : index
    %9 = vector.load %arg1[%c1_8, %c0_9, %c0_10] : memref<4x16x8xbf16, #tpu.memory_space<vmem>>, vector<1x16x8xbf16>
    %10 = vector.shape_cast %9 : vector<1x16x8xbf16> to vector<16x8xbf16>
    %cst_11 = arith.constant dense<0.000000e+00> : vector<16x72xf32>
    %11 = tpu.matmul %10, %8, %cst_11 {dimension_numbers = #tpu.dot_dimension_numbers<[1], [0], [0], [1], [0, 0, 1, 1], [], []>} : vector<16x8xbf16>, vector<8x72xbf16>, vector<16x72xf32> -> vector<16x72xf32>
    %12 = arith.addf %6, %11 : vector<16x72xf32>
    %c0_12 = arith.constant 0 : index
    %c0_13 = arith.constant 0 : index
    %c9 = arith.constant 9 : index
    %13 = vector.load %arg2[%c0_12, %c0_13, %c9] : memref<1x8x82xbf16, #tpu.memory_space<vmem>>, vector<1x8x72xbf16>
    %14 = vector.shape_cast %13 : vector<1x8x72xbf16> to vector<8x72xbf16>
    %c2 = arith.constant 2 : index
    %c0_14 = arith.constant 0 : index
    %c0_15 = arith.constant 0 : index
    %15 = vector.load %arg1[%c2, %c0_14, %c0_15] : memref<4x16x8xbf16, #tpu.memory_space<vmem>>, vector<1x16x8xbf16>
    %16 = vector.shape_cast %15 : vector<1x16x8xbf16> to vector<16x8xbf16>
    %cst_16 = arith.constant dense<0.000000e+00> : vector<16x72xf32>
    %17 = tpu.matmul %16, %14, %cst_16 {dimension_numbers = #tpu.dot_dimension_numbers<[1], [0], [0], [1], [0, 0, 1, 1], [], []>} : vector<16x8xbf16>, vector<8x72xbf16>, vector<16x72xf32> -> vector<16x72xf32>
    %18 = arith.addf %12, %17 : vector<16x72xf32>
    %c0_17 = arith.constant 0 : index
    %c0_18 = arith.constant 0 : index
    %c10 = arith.constant 10 : index
    %19 = vector.load %arg2[%c0_17, %c0_18, %c10] : memref<1x8x82xbf16, #tpu.memory_space<vmem>>, vector<1x8x72xbf16>
    %20 = vector.shape_cast %19 : vector<1x8x72xbf16> to vector<8x72xbf16>
    %c3 = arith.constant 3 : index
    %c0_19 = arith.constant 0 : index
    %c0_20 = arith.constant 0 : index
    %21 = vector.load %arg1[%c3, %c0_19, %c0_20] : memref<4x16x8xbf16, #tpu.memory_space<vmem>>, vector<1x16x8xbf16>
    %22 = vector.shape_cast %21 : vector<1x16x8xbf16> to vector<16x8xbf16>
    %cst_21 = arith.constant dense<0.000000e+00> : vector<16x72xf32>
    %23 = tpu.matmul %22, %20, %cst_21 {dimension_numbers = #tpu.dot_dimension_numbers<[1], [0], [0], [1], [0, 0, 1, 1], [], []>} : vector<16x8xbf16>, vector<8x72xbf16>, vector<16x72xf32> -> vector<16x72xf32>
    %24 = arith.addf %18, %23 : vector<16x72xf32>
    %c0_22 = arith.constant 0 : index
    %c0_23 = arith.constant 0 : index
    %25 = vector.load %arg3[%c0_22, %c0_23] : memref<16x1xf32, #tpu.memory_space<vmem>>, vector<16x1xf32>
    %26 = vector.broadcast %25 : vector<16x1xf32> to vector<16x72xf32>
    %27 = arith.addf %24, %26 : vector<16x72xf32>
    %cst_24 = arith.constant 0.000000e+00 : f32
    %28 = vector.broadcast %cst_24 : f32 to vector<16x72xf32>
    %29 = arith.cmpf oge, %27, %28 : vector<16x72xf32>
    %cst_25 = arith.constant 2.000000e-01 : f32
    %30 = vector.broadcast %cst_25 : f32 to vector<16x72xf32>
    %31 = arith.mulf %27, %30 : vector<16x72xf32>
    %32 = arith.select %29, %27, %31 : vector<16x72xi1>, vector<16x72xf32>
    %33 = arith.truncf %32 : vector<16x72xf32> to vector<16x72xbf16>
    %c0_26 = arith.constant 0 : index
    %c0_27 = arith.constant 0 : index
    %c0_28 = arith.constant 0 : index
    %34 = vector.load %arg4[%c0_26, %c0_27, %c0_28] : memref<1x16x72xbf16, #tpu.memory_space<vmem>>, vector<1x16x72xbf16>
    %35 = vector.shape_cast %34 : vector<1x16x72xbf16> to vector<16x72xbf16>
    %36 = vector.shape_cast %33 : vector<16x72xbf16> to vector<1x16x72xbf16>
    tpu.vector_store %arg4[%c0_26, %c0_27, %c0_28], %36 {strides = array<i32>} : memref<1x16x72xbf16, #tpu.memory_space<vmem>>, vector<1x16x72xbf16>,
    return
  }
  func.func @transform_0(%arg0: i32) -> (i32, i32, i32) {
    %c0_i32 = arith.constant 0 : i32
    %c0_i32_0 = arith.constant 0 : i32
    %c0_i32_1 = arith.constant 0 : i32
    %c0_i32_2 = arith.constant 0 : i32
    return %c0_i32, %c0_i32_0, %c0_i32_1 : i32, i32, i32
  }
  func.func @transform_1(%arg0: i32) -> (i32, i32, i32) {
    %c0_i32 = arith.constant 0 : i32
    %c0_i32_0 = arith.constant 0 : i32
    %c0_i32_1 = arith.constant 0 : i32
    return %arg0, %c0_i32, %c0_i32_0 : i32, i32, i32
  }
  func.func @transform_2(%arg0: i32) -> (i32, i32) {
    %c0_i32 = arith.constant 0 : i32
    %c0_i32_0 = arith.constant 0 : i32
    %c0_i32_1 = arith.constant 0 : i32
    return %c0_i32, %c0_i32_0 : i32, i32
  }
  func.func @transform_3(%arg0: i32) -> (i32, i32, i32) {
    %c0_i32 = arith.constant 0 : i32
    %c0_i32_0 = arith.constant 0 : i32
    %c0_i32_1 = arith.constant 0 : i32
    return %arg0, %c0_i32, %c0_i32_0 : i32, i32, i32
  }
}

module attributes {stable_mosaic.version = 11 : i64} {
  func.func @_fused_conv_kernel(%arg0: i32, %arg1: memref<4x32x64xbf16, #tpu.memory_space<vmem>>, %arg2: memref<1x64x26xbf16, #tpu.memory_space<vmem>>, %arg3: memref<32x1xf32, #tpu.memory_space<vmem>>, %arg4: memref<1x32x20xbf16, #tpu.memory_space<vmem>>) attributes {dimension_semantics = [#tpu.dimension_semantics<parallel>], iteration_bounds = array<i64: 2>, scalar_prefetch = 0 : i64, scratch_operands = 0 : i64, tpu.core_type = #tpu.core_type<tc>, window_params = [{pipeline_mode = #tpu.pipeline_mode<synchronous>, transform_indices = @transform_0, window_bounds = array<i64: 4, 32, 64>}, {transform_indices = @transform_1, window_bounds = array<i64: 1, 64, 26>}, {pipeline_mode = #tpu.pipeline_mode<synchronous>, transform_indices = @transform_2, window_bounds = array<i64: 32, 1>}, {transform_indices = @transform_3, window_bounds = array<i64: 1, 32, 20>}]} {
    %cst = arith.constant 0.000000e+00 : f32
    %0 = vector.broadcast %cst : f32 to vector<32x20xf32>
    %c0 = arith.constant 0 : index
    %c0_0 = arith.constant 0 : index
    %c0_1 = arith.constant 0 : index
    %1 = vector.load %arg2[%c0, %c0_0, %c0_1] : memref<1x64x26xbf16, #tpu.memory_space<vmem>>, vector<1x64x20xbf16>
    %2 = vector.shape_cast %1 : vector<1x64x20xbf16> to vector<64x20xbf16>
    %c0_2 = arith.constant 0 : index
    %c0_3 = arith.constant 0 : index
    %c0_4 = arith.constant 0 : index
    %3 = vector.load %arg1[%c0_2, %c0_3, %c0_4] : memref<4x32x64xbf16, #tpu.memory_space<vmem>>, vector<1x32x64xbf16>
    %4 = vector.shape_cast %3 : vector<1x32x64xbf16> to vector<32x64xbf16>
    %cst_5 = arith.constant dense<0.000000e+00> : vector<32x20xf32>
    %5 = tpu.matmul %4, %2, %cst_5 {dimension_numbers = #tpu.dot_dimension_numbers<[1], [0], [0], [1], [0, 0, 1, 1], [], []>} : vector<32x64xbf16>, vector<64x20xbf16>, vector<32x20xf32> -> vector<32x20xf32>
    %6 = arith.addf %0, %5 : vector<32x20xf32>
    %c0_6 = arith.constant 0 : index
    %c0_7 = arith.constant 0 : index
    %c1 = arith.constant 1 : index
    %7 = vector.load %arg2[%c0_6, %c0_7, %c1] : memref<1x64x26xbf16, #tpu.memory_space<vmem>>, vector<1x64x20xbf16>
    %8 = vector.shape_cast %7 : vector<1x64x20xbf16> to vector<64x20xbf16>
    %c1_8 = arith.constant 1 : index
    %c0_9 = arith.constant 0 : index
    %c0_10 = arith.constant 0 : index
    %9 = vector.load %arg1[%c1_8, %c0_9, %c0_10] : memref<4x32x64xbf16, #tpu.memory_space<vmem>>, vector<1x32x64xbf16>
    %10 = vector.shape_cast %9 : vector<1x32x64xbf16> to vector<32x64xbf16>
    %cst_11 = arith.constant dense<0.000000e+00> : vector<32x20xf32>
    %11 = tpu.matmul %10, %8, %cst_11 {dimension_numbers = #tpu.dot_dimension_numbers<[1], [0], [0], [1], [0, 0, 1, 1], [], []>} : vector<32x64xbf16>, vector<64x20xbf16>, vector<32x20xf32> -> vector<32x20xf32>
    %12 = arith.addf %6, %11 : vector<32x20xf32>
    %c0_12 = arith.constant 0 : index
    %c0_13 = arith.constant 0 : index
    %c5 = arith.constant 5 : index
    %13 = vector.load %arg2[%c0_12, %c0_13, %c5] : memref<1x64x26xbf16, #tpu.memory_space<vmem>>, vector<1x64x20xbf16>
    %14 = vector.shape_cast %13 : vector<1x64x20xbf16> to vector<64x20xbf16>
    %c2 = arith.constant 2 : index
    %c0_14 = arith.constant 0 : index
    %c0_15 = arith.constant 0 : index
    %15 = vector.load %arg1[%c2, %c0_14, %c0_15] : memref<4x32x64xbf16, #tpu.memory_space<vmem>>, vector<1x32x64xbf16>
    %16 = vector.shape_cast %15 : vector<1x32x64xbf16> to vector<32x64xbf16>
    %cst_16 = arith.constant dense<0.000000e+00> : vector<32x20xf32>
    %17 = tpu.matmul %16, %14, %cst_16 {dimension_numbers = #tpu.dot_dimension_numbers<[1], [0], [0], [1], [0, 0, 1, 1], [], []>} : vector<32x64xbf16>, vector<64x20xbf16>, vector<32x20xf32> -> vector<32x20xf32>
    %18 = arith.addf %12, %17 : vector<32x20xf32>
    %c0_17 = arith.constant 0 : index
    %c0_18 = arith.constant 0 : index
    %c6 = arith.constant 6 : index
    %19 = vector.load %arg2[%c0_17, %c0_18, %c6] : memref<1x64x26xbf16, #tpu.memory_space<vmem>>, vector<1x64x20xbf16>
    %20 = vector.shape_cast %19 : vector<1x64x20xbf16> to vector<64x20xbf16>
    %c3 = arith.constant 3 : index
    %c0_19 = arith.constant 0 : index
    %c0_20 = arith.constant 0 : index
    %21 = vector.load %arg1[%c3, %c0_19, %c0_20] : memref<4x32x64xbf16, #tpu.memory_space<vmem>>, vector<1x32x64xbf16>
    %22 = vector.shape_cast %21 : vector<1x32x64xbf16> to vector<32x64xbf16>
    %cst_21 = arith.constant dense<0.000000e+00> : vector<32x20xf32>
    %23 = tpu.matmul %22, %20, %cst_21 {dimension_numbers = #tpu.dot_dimension_numbers<[1], [0], [0], [1], [0, 0, 1, 1], [], []>} : vector<32x64xbf16>, vector<64x20xbf16>, vector<32x20xf32> -> vector<32x20xf32>
    %24 = arith.addf %18, %23 : vector<32x20xf32>
    %c0_22 = arith.constant 0 : index
    %c0_23 = arith.constant 0 : index
    %25 = vector.load %arg3[%c0_22, %c0_23] : memref<32x1xf32, #tpu.memory_space<vmem>>, vector<32x1xf32>
    %26 = vector.broadcast %25 : vector<32x1xf32> to vector<32x20xf32>
    %27 = arith.addf %24, %26 : vector<32x20xf32>
    %cst_24 = arith.constant 0.000000e+00 : f32
    %28 = vector.broadcast %cst_24 : f32 to vector<32x20xf32>
    %29 = arith.cmpf oge, %27, %28 : vector<32x20xf32>
    %cst_25 = arith.constant 2.000000e-01 : f32
    %30 = vector.broadcast %cst_25 : f32 to vector<32x20xf32>
    %31 = arith.mulf %27, %30 : vector<32x20xf32>
    %32 = arith.select %29, %27, %31 : vector<32x20xi1>, vector<32x20xf32>
    %33 = arith.truncf %32 : vector<32x20xf32> to vector<32x20xbf16>
    %c0_26 = arith.constant 0 : index
    %c0_27 = arith.constant 0 : index
    %c0_28 = arith.constant 0 : index
    %34 = vector.load %arg4[%c0_26, %c0_27, %c0_28] : memref<1x32x20xbf16, #tpu.memory_space<vmem>>, vector<1x32x20xbf16>
    %35 = vector.shape_cast %34 : vector<1x32x20xbf16> to vector<32x20xbf16>
    %36 = vector.shape_cast %33 : vector<32x20xbf16> to vector<1x32x20xbf16>
    tpu.vector_store %arg4[%c0_26, %c0_27, %c0_28], %36 {strides = array<i32>} : memref<1x32x20xbf16, #tpu.memory_space<vmem>>, vector<1x32x20xbf16>,
    return
  }
  func.func @transform_0(%arg0: i32) -> (i32, i32, i32) {
    %c0_i32 = arith.constant 0 : i32
    %c0_i32_0 = arith.constant 0 : i32
    %c0_i32_1 = arith.constant 0 : i32
    %c0_i32_2 = arith.constant 0 : i32
    return %c0_i32, %c0_i32_0, %c0_i32_1 : i32, i32, i32
  }
  func.func @transform_1(%arg0: i32) -> (i32, i32, i32) {
    %c0_i32 = arith.constant 0 : i32
    %c0_i32_0 = arith.constant 0 : i32
    %c0_i32_1 = arith.constant 0 : i32
    return %arg0, %c0_i32, %c0_i32_0 : i32, i32, i32
  }
  func.func @transform_2(%arg0: i32) -> (i32, i32) {
    %c0_i32 = arith.constant 0 : i32
    %c0_i32_0 = arith.constant 0 : i32
    %c0_i32_1 = arith.constant 0 : i32
    return %c0_i32, %c0_i32_0 : i32, i32
  }
  func.func @transform_3(%arg0: i32) -> (i32, i32, i32) {
    %c0_i32 = arith.constant 0 : i32
    %c0_i32_0 = arith.constant 0 : i32
    %c0_i32_1 = arith.constant 0 : i32
    return %arg0, %c0_i32, %c0_i32_0 : i32, i32, i32
  }
}

module attributes {stable_mosaic.version = 11 : i64} {
  func.func @_rowmm_kernel(%arg0: i32, %arg1: memref<8x4xbf16, #tpu.memory_space<vmem>>, %arg2: memref<4x16xbf16, #tpu.memory_space<vmem>>, %arg3: memref<8x16xbf16, #tpu.memory_space<vmem>>) attributes {dimension_semantics = [#tpu.dimension_semantics<parallel>], iteration_bounds = array<i64: 2>, scalar_prefetch = 0 : i64, scratch_operands = 0 : i64, tpu.core_type = #tpu.core_type<tc>, window_params = [{transform_indices = @transform_0, window_bounds = array<i64: 8, 4>}, {pipeline_mode = #tpu.pipeline_mode<synchronous>, transform_indices = @transform_1, window_bounds = array<i64: 4, 16>}, {transform_indices = @transform_2, window_bounds = array<i64: 8, 16>}]} {
    %c0 = arith.constant 0 : index
    %c0_0 = arith.constant 0 : index
    %0 = vector.load %arg1[%c0, %c0_0] : memref<8x4xbf16, #tpu.memory_space<vmem>>, vector<8x4xbf16>
    %c0_1 = arith.constant 0 : index
    %c0_2 = arith.constant 0 : index
    %1 = vector.load %arg2[%c0_1, %c0_2] : memref<4x16xbf16, #tpu.memory_space<vmem>>, vector<4x16xbf16>
    %cst = arith.constant dense<0.000000e+00> : vector<8x16xf32>
    %2 = tpu.matmul %0, %1, %cst {dimension_numbers = #tpu.dot_dimension_numbers<[1], [0], [0], [1], [0, 0, 1, 1], [], []>} : vector<8x4xbf16>, vector<4x16xbf16>, vector<8x16xf32> -> vector<8x16xf32>
    %3 = arith.truncf %2 : vector<8x16xf32> to vector<8x16xbf16>
    %c0_3 = arith.constant 0 : index
    %c0_4 = arith.constant 0 : index
    %4 = vector.load %arg3[%c0_3, %c0_4] : memref<8x16xbf16, #tpu.memory_space<vmem>>, vector<8x16xbf16>
    tpu.vector_store %arg3[%c0_3, %c0_4], %3 {strides = array<i32>} : memref<8x16xbf16, #tpu.memory_space<vmem>>, vector<8x16xbf16>,
    return
  }
  func.func @transform_0(%arg0: i32) -> (i32, i32) {
    %c0_i32 = arith.constant 0 : i32
    %c0_i32_0 = arith.constant 0 : i32
    return %arg0, %c0_i32 : i32, i32
  }
  func.func @transform_1(%arg0: i32) -> (i32, i32) {
    %c0_i32 = arith.constant 0 : i32
    %c0_i32_0 = arith.constant 0 : i32
    %c0_i32_1 = arith.constant 0 : i32
    return %c0_i32, %c0_i32_0 : i32, i32
  }
  func.func @transform_2(%arg0: i32) -> (i32, i32) {
    %c0_i32 = arith.constant 0 : i32
    %c0_i32_0 = arith.constant 0 : i32
    return %arg0, %c0_i32 : i32, i32
  }
}

module attributes {stable_mosaic.version = 11 : i64} {
  func.func @_fused_conv_kernel(%arg0: i32, %arg1: memref<9x2x32xbf16, #tpu.memory_space<vmem>>, %arg2: memref<1x32x38xbf16, #tpu.memory_space<vmem>>, %arg3: memref<2x1xf32, #tpu.memory_space<vmem>>, %arg4: memref<1x2x24xbf16, #tpu.memory_space<vmem>>) attributes {dimension_semantics = [#tpu.dimension_semantics<parallel>], iteration_bounds = array<i64: 2>, scalar_prefetch = 0 : i64, scratch_operands = 0 : i64, tpu.core_type = #tpu.core_type<tc>, window_params = [{pipeline_mode = #tpu.pipeline_mode<synchronous>, transform_indices = @transform_0, window_bounds = array<i64: 9, 2, 32>}, {transform_indices = @transform_1, window_bounds = array<i64: 1, 32, 38>}, {pipeline_mode = #tpu.pipeline_mode<synchronous>, transform_indices = @transform_2, window_bounds = array<i64: 2, 1>}, {transform_indices = @transform_3, window_bounds = array<i64: 1, 2, 24>}]} {
    %cst = arith.constant 0.000000e+00 : f32
    %0 = vector.broadcast %cst : f32 to vector<2x24xf32>
    %c0 = arith.constant 0 : index
    %c0_0 = arith.constant 0 : index
    %c0_1 = arith.constant 0 : index
    %1 = vector.load %arg2[%c0, %c0_0, %c0_1] : memref<1x32x38xbf16, #tpu.memory_space<vmem>>, vector<1x32x24xbf16>
    %2 = vector.shape_cast %1 : vector<1x32x24xbf16> to vector<32x24xbf16>
    %c0_2 = arith.constant 0 : index
    %c0_3 = arith.constant 0 : index
    %c0_4 = arith.constant 0 : index
    %3 = vector.load %arg1[%c0_2, %c0_3, %c0_4] : memref<9x2x32xbf16, #tpu.memory_space<vmem>>, vector<1x2x32xbf16>
    %4 = vector.shape_cast %3 : vector<1x2x32xbf16> to vector<2x32xbf16>
    %cst_5 = arith.constant dense<0.000000e+00> : vector<2x24xf32>
    %5 = tpu.matmul %4, %2, %cst_5 {dimension_numbers = #tpu.dot_dimension_numbers<[1], [0], [0], [1], [0, 0, 1, 1], [], []>} : vector<2x32xbf16>, vector<32x24xbf16>, vector<2x24xf32> -> vector<2x24xf32>
    %6 = arith.addf %0, %5 : vector<2x24xf32>
    %c0_6 = arith.constant 0 : index
    %c0_7 = arith.constant 0 : index
    %c1 = arith.constant 1 : index
    %7 = vector.load %arg2[%c0_6, %c0_7, %c1] : memref<1x32x38xbf16, #tpu.memory_space<vmem>>, vector<1x32x24xbf16>
    %8 = vector.shape_cast %7 : vector<1x32x24xbf16> to vector<32x24xbf16>
    %c1_8 = arith.constant 1 : index
    %c0_9 = arith.constant 0 : index
    %c0_10 = arith.constant 0 : index
    %9 = vector.load %arg1[%c1_8, %c0_9, %c0_10] : memref<9x2x32xbf16, #tpu.memory_space<vmem>>, vector<1x2x32xbf16>
    %10 = vector.shape_cast %9 : vector<1x2x32xbf16> to vector<2x32xbf16>
    %cst_11 = arith.constant dense<0.000000e+00> : vector<2x24xf32>
    %11 = tpu.matmul %10, %8, %cst_11 {dimension_numbers = #tpu.dot_dimension_numbers<[1], [0], [0], [1], [0, 0, 1, 1], [], []>} : vector<2x32xbf16>, vector<32x24xbf16>, vector<2x24xf32> -> vector<2x24xf32>
    %12 = arith.addf %6, %11 : vector<2x24xf32>
    %c0_12 = arith.constant 0 : index
    %c0_13 = arith.constant 0 : index
    %c2 = arith.constant 2 : index
    %13 = vector.load %arg2[%c0_12, %c0_13, %c2] : memref<1x32x38xbf16, #tpu.memory_space<vmem>>, vector<1x32x24xbf16>
    %14 = vector.shape_cast %13 : vector<1x32x24xbf16> to vector<32x24xbf16>
    %c2_14 = arith.constant 2 : index
    %c0_15 = arith.constant 0 : index
    %c0_16 = arith.constant 0 : index
    %15 = vector.load %arg1[%c2_14, %c0_15, %c0_16] : memref<9x2x32xbf16, #tpu.memory_space<vmem>>, vector<1x2x32xbf16>
    %16 = vector.shape_cast %15 : vector<1x2x32xbf16> to vector<2x32xbf16>
    %cst_17 = arith.constant dense<0.000000e+00> : vector<2x24xf32>
    %17 = tpu.matmul %16, %14, %cst_17 {dimension_numbers = #tpu.dot_dimension_numbers<[1], [0], [0], [1], [0, 0, 1, 1], [], []>} : vector<2x32xbf16>, vector<32x24xbf16>, vector<2x24xf32> -> vector<2x24xf32>
    %18 = arith.addf %12, %17 : vector<2x24xf32>
    %c0_18 = arith.constant 0 : index
    %c0_19 = arith.constant 0 : index
    %c6 = arith.constant 6 : index
    %19 = vector.load %arg2[%c0_18, %c0_19, %c6] : memref<1x32x38xbf16, #tpu.memory_space<vmem>>, vector<1x32x24xbf16>
    %20 = vector.shape_cast %19 : vector<1x32x24xbf16> to vector<32x24xbf16>
    %c3 = arith.constant 3 : index
    %c0_20 = arith.constant 0 : index
    %c0_21 = arith.constant 0 : index
    %21 = vector.load %arg1[%c3, %c0_20, %c0_21] : memref<9x2x32xbf16, #tpu.memory_space<vmem>>, vector<1x2x32xbf16>
    %22 = vector.shape_cast %21 : vector<1x2x32xbf16> to vector<2x32xbf16>
    %cst_22 = arith.constant dense<0.000000e+00> : vector<2x24xf32>
    %23 = tpu.matmul %22, %20, %cst_22 {dimension_numbers = #tpu.dot_dimension_numbers<[1], [0], [0], [1], [0, 0, 1, 1], [], []>} : vector<2x32xbf16>, vector<32x24xbf16>, vector<2x24xf32> -> vector<2x24xf32>
    %24 = arith.addf %18, %23 : vector<2x24xf32>
    %c0_23 = arith.constant 0 : index
    %c0_24 = arith.constant 0 : index
    %c7 = arith.constant 7 : index
    %25 = vector.load %arg2[%c0_23, %c0_24, %c7] : memref<1x32x38xbf16, #tpu.memory_space<vmem>>, vector<1x32x24xbf16>
    %26 = vector.shape_cast %25 : vector<1x32x24xbf16> to vector<32x24xbf16>
    %c4 = arith.constant 4 : index
    %c0_25 = arith.constant 0 : index
    %c0_26 = arith.constant 0 : index
    %27 = vector.load %arg1[%c4, %c0_25, %c0_26] : memref<9x2x32xbf16, #tpu.memory_space<vmem>>, vector<1x2x32xbf16>
    %28 = vector.shape_cast %27 : vector<1x2x32xbf16> to vector<2x32xbf16>
    %cst_27 = arith.constant dense<0.000000e+00> : vector<2x24xf32>
    %29 = tpu.matmul %28, %26, %cst_27 {dimension_numbers = #tpu.dot_dimension_numbers<[1], [0], [0], [1], [0, 0, 1, 1], [], []>} : vector<2x32xbf16>, vector<32x24xbf16>, vector<2x24xf32> -> vector<2x24xf32>
    %30 = arith.addf %24, %29 : vector<2x24xf32>
    %c0_28 = arith.constant 0 : index
    %c0_29 = arith.constant 0 : index
    %c8 = arith.constant 8 : index
    %31 = vector.load %arg2[%c0_28, %c0_29, %c8] : memref<1x32x38xbf16, #tpu.memory_space<vmem>>, vector<1x32x24xbf16>
    %32 = vector.shape_cast %31 : vector<1x32x24xbf16> to vector<32x24xbf16>
    %c5 = arith.constant 5 : index
    %c0_30 = arith.constant 0 : index
    %c0_31 = arith.constant 0 : index
    %33 = vector.load %arg1[%c5, %c0_30, %c0_31] : memref<9x2x32xbf16, #tpu.memory_space<vmem>>, vector<1x2x32xbf16>
    %34 = vector.shape_cast %33 : vector<1x2x32xbf16> to vector<2x32xbf16>
    %cst_32 = arith.constant dense<0.000000e+00> : vector<2x24xf32>
    %35 = tpu.matmul %34, %32, %cst_32 {dimension_numbers = #tpu.dot_dimension_numbers<[1], [0], [0], [1], [0, 0, 1, 1], [], []>} : vector<2x32xbf16>, vector<32x24xbf16>, vector<2x24xf32> -> vector<2x24xf32>
    %36 = arith.addf %30, %35 : vector<2x24xf32>
    %c0_33 = arith.constant 0 : index
    %c0_34 = arith.constant 0 : index
    %c12 = arith.constant 12 : index
    %37 = vector.load %arg2[%c0_33, %c0_34, %c12] : memref<1x32x38xbf16, #tpu.memory_space<vmem>>, vector<1x32x24xbf16>
    %38 = vector.shape_cast %37 : vector<1x32x24xbf16> to vector<32x24xbf16>
    %c6_35 = arith.constant 6 : index
    %c0_36 = arith.constant 0 : index
    %c0_37 = arith.constant 0 : index
    %39 = vector.load %arg1[%c6_35, %c0_36, %c0_37] : memref<9x2x32xbf16, #tpu.memory_space<vmem>>, vector<1x2x32xbf16>
    %40 = vector.shape_cast %39 : vector<1x2x32xbf16> to vector<2x32xbf16>
    %cst_38 = arith.constant dense<0.000000e+00> : vector<2x24xf32>
    %41 = tpu.matmul %40, %38, %cst_38 {dimension_numbers = #tpu.dot_dimension_numbers<[1], [0], [0], [1], [0, 0, 1, 1], [], []>} : vector<2x32xbf16>, vector<32x24xbf16>, vector<2x24xf32> -> vector<2x24xf32>
    %42 = arith.addf %36, %41 : vector<2x24xf32>
    %c0_39 = arith.constant 0 : index
    %c0_40 = arith.constant 0 : index
    %c13 = arith.constant 13 : index
    %43 = vector.load %arg2[%c0_39, %c0_40, %c13] : memref<1x32x38xbf16, #tpu.memory_space<vmem>>, vector<1x32x24xbf16>
    %44 = vector.shape_cast %43 : vector<1x32x24xbf16> to vector<32x24xbf16>
    %c7_41 = arith.constant 7 : index
    %c0_42 = arith.constant 0 : index
    %c0_43 = arith.constant 0 : index
    %45 = vector.load %arg1[%c7_41, %c0_42, %c0_43] : memref<9x2x32xbf16, #tpu.memory_space<vmem>>, vector<1x2x32xbf16>
    %46 = vector.shape_cast %45 : vector<1x2x32xbf16> to vector<2x32xbf16>
    %cst_44 = arith.constant dense<0.000000e+00> : vector<2x24xf32>
    %47 = tpu.matmul %46, %44, %cst_44 {dimension_numbers = #tpu.dot_dimension_numbers<[1], [0], [0], [1], [0, 0, 1, 1], [], []>} : vector<2x32xbf16>, vector<32x24xbf16>, vector<2x24xf32> -> vector<2x24xf32>
    %48 = arith.addf %42, %47 : vector<2x24xf32>
    %c0_45 = arith.constant 0 : index
    %c0_46 = arith.constant 0 : index
    %c14 = arith.constant 14 : index
    %49 = vector.load %arg2[%c0_45, %c0_46, %c14] : memref<1x32x38xbf16, #tpu.memory_space<vmem>>, vector<1x32x24xbf16>
    %50 = vector.shape_cast %49 : vector<1x32x24xbf16> to vector<32x24xbf16>
    %c8_47 = arith.constant 8 : index
    %c0_48 = arith.constant 0 : index
    %c0_49 = arith.constant 0 : index
    %51 = vector.load %arg1[%c8_47, %c0_48, %c0_49] : memref<9x2x32xbf16, #tpu.memory_space<vmem>>, vector<1x2x32xbf16>
    %52 = vector.shape_cast %51 : vector<1x2x32xbf16> to vector<2x32xbf16>
    %cst_50 = arith.constant dense<0.000000e+00> : vector<2x24xf32>
    %53 = tpu.matmul %52, %50, %cst_50 {dimension_numbers = #tpu.dot_dimension_numbers<[1], [0], [0], [1], [0, 0, 1, 1], [], []>} : vector<2x32xbf16>, vector<32x24xbf16>, vector<2x24xf32> -> vector<2x24xf32>
    %54 = arith.addf %48, %53 : vector<2x24xf32>
    %c0_51 = arith.constant 0 : index
    %c0_52 = arith.constant 0 : index
    %55 = vector.load %arg3[%c0_51, %c0_52] : memref<2x1xf32, #tpu.memory_space<vmem>>, vector<2x1xf32>
    %56 = vector.broadcast %55 : vector<2x1xf32> to vector<2x24xf32>
    %57 = arith.addf %54, %56 : vector<2x24xf32>
    %58 = arith.truncf %57 : vector<2x24xf32> to vector<2x24xbf16>
    %c0_53 = arith.constant 0 : index
    %c0_54 = arith.constant 0 : index
    %c0_55 = arith.constant 0 : index
    %59 = vector.load %arg4[%c0_53, %c0_54, %c0_55] : memref<1x2x24xbf16, #tpu.memory_space<vmem>>, vector<1x2x24xbf16>
    %60 = vector.shape_cast %59 : vector<1x2x24xbf16> to vector<2x24xbf16>
    %61 = vector.shape_cast %58 : vector<2x24xbf16> to vector<1x2x24xbf16>
    tpu.vector_store %arg4[%c0_53, %c0_54, %c0_55], %61 {strides = array<i32>} : memref<1x2x24xbf16, #tpu.memory_space<vmem>>, vector<1x2x24xbf16>,
    return
  }
  func.func @transform_0(%arg0: i32) -> (i32, i32, i32) {
    %c0_i32 = arith.constant 0 : i32
    %c0_i32_0 = arith.constant 0 : i32
    %c0_i32_1 = arith.constant 0 : i32
    %c0_i32_2 = arith.constant 0 : i32
    return %c0_i32, %c0_i32_0, %c0_i32_1 : i32, i32, i32
  }
  func.func @transform_1(%arg0: i32) -> (i32, i32, i32) {
    %c0_i32 = arith.constant 0 : i32
    %c0_i32_0 = arith.constant 0 : i32
    %c0_i32_1 = arith.constant 0 : i32
    return %arg0, %c0_i32, %c0_i32_0 : i32, i32, i32
  }
  func.func @transform_2(%arg0: i32) -> (i32, i32) {
    %c0_i32 = arith.constant 0 : i32
    %c0_i32_0 = arith.constant 0 : i32
    %c0_i32_1 = arith.constant 0 : i32
    return %c0_i32, %c0_i32_0 : i32, i32
  }
  func.func @transform_3(%arg0: i32) -> (i32, i32, i32) {
    %c0_i32 = arith.constant 0 : i32
    %c0_i32_0 = arith.constant 0 : i32
    %c0_i32_1 = arith.constant 0 : i32
    return %arg0, %c0_i32, %c0_i32_0 : i32, i32, i32
  }
}

module attributes {stable_mosaic.version = 11 : i64} {
  func.func @_rowmm_kernel(%arg0: i32, %arg1: memref<32x4xbf16, #tpu.memory_space<vmem>>, %arg2: memref<4x16xbf16, #tpu.memory_space<vmem>>, %arg3: memref<32x16xf32, #tpu.memory_space<vmem>>) attributes {dimension_semantics = [#tpu.dimension_semantics<parallel>], iteration_bounds = array<i64: 2>, scalar_prefetch = 0 : i64, scratch_operands = 0 : i64, tpu.core_type = #tpu.core_type<tc>, window_params = [{transform_indices = @transform_0, window_bounds = array<i64: 32, 4>}, {pipeline_mode = #tpu.pipeline_mode<synchronous>, transform_indices = @transform_1, window_bounds = array<i64: 4, 16>}, {transform_indices = @transform_2, window_bounds = array<i64: 32, 16>}]} {
    %c0 = arith.constant 0 : index
    %c0_0 = arith.constant 0 : index
    %0 = vector.load %arg1[%c0, %c0_0] : memref<32x4xbf16, #tpu.memory_space<vmem>>, vector<32x4xbf16>
    %c0_1 = arith.constant 0 : index
    %c0_2 = arith.constant 0 : index
    %1 = vector.load %arg2[%c0_1, %c0_2] : memref<4x16xbf16, #tpu.memory_space<vmem>>, vector<4x16xbf16>
    %cst = arith.constant dense<0.000000e+00> : vector<32x16xf32>
    %2 = tpu.matmul %0, %1, %cst {dimension_numbers = #tpu.dot_dimension_numbers<[1], [0], [0], [1], [0, 0, 1, 1], [], []>} : vector<32x4xbf16>, vector<4x16xbf16>, vector<32x16xf32> -> vector<32x16xf32>
    %c0_3 = arith.constant 0 : index
    %c0_4 = arith.constant 0 : index
    %3 = vector.load %arg3[%c0_3, %c0_4] : memref<32x16xf32, #tpu.memory_space<vmem>>, vector<32x16xf32>
    tpu.vector_store %arg3[%c0_3, %c0_4], %2 {strides = array<i32>} : memref<32x16xf32, #tpu.memory_space<vmem>>, vector<32x16xf32>,
    return
  }
  func.func @transform_0(%arg0: i32) -> (i32, i32) {
    %c0_i32 = arith.constant 0 : i32
    %c0_i32_0 = arith.constant 0 : i32
    return %arg0, %c0_i32 : i32, i32
  }
  func.func @transform_1(%arg0: i32) -> (i32, i32) {
    %c0_i32 = arith.constant 0 : i32
    %c0_i32_0 = arith.constant 0 : i32
    %c0_i32_1 = arith.constant 0 : i32
    return %c0_i32, %c0_i32_0 : i32, i32
  }
  func.func @transform_2(%arg0: i32) -> (i32, i32) {
    %c0_i32 = arith.constant 0 : i32
    %c0_i32_0 = arith.constant 0 : i32
    return %arg0, %c0_i32 : i32, i32
  }
}

</mosaic_0001>

<llo_original>
// kernel: lapirn_forward.5
$region0: #{lapirn_forward.5}
  #allocation0 [shape = 'u32[]', space=smem, size = 0x4, offset = 0x4, fixed_abs, tag = 'smem constant byte address 0x4 - core index']
  #allocation1 [shape = 'u32[144,128]{1,0:T(1,128)}', space=vmem, size = 0x12000, scoped, tag = 'internal scratch']
  %s0 = inlined_call_operand.vmem [shape: bf16[4,16,8], index: 0, kind: input, shape index: {}]
  %s1 = inlined_call_operand.vmem [shape: bf16[2,8,82], index: 1, kind: input, shape index: {}]
  %s2 = inlined_call_operand.vmem [shape: f32[16,1], index: 2, kind: input, shape index: {}]
  %s3 = inlined_call_operand.vmem [shape: bf16[2,16,72], index: 3, kind: output, shape index: {}]
  %s4 = sld [smem:[#allocation0]]
  $region45: #{lapirn_forward.5} parent=0
    _
  %s6 = ssub.s32 1, %s4
  %s7 = scalar_select 0, %s6, %s4
  loop: start=0, step=1, limit=4
  $region2: #{lapirn_forward.5} parent=0 // loop_pre_header
    _
  $region3: #{lapirn_forward.5} parent=0 // loop_header
    %s9 = sphi 0, %s13
    %p10 = scmp.ge.s32.totalorder %s9, 4
    %s17 = sphi 0, %s17
    %s19 = sphi 0, %s17
    %s20 = sphi 0, %s19
    %s34 = sphi 0, %s20
    %s40 = sphi 0, %s42
    %s43 = sphi 0, %s40
    %s44 = sphi 0, %s43
    %s60 = sphi 0, %s44
    %s64 = sphi 0, %s64
    %s66 = sphi 0, %s64
    %s67 = sphi 0, %s66
    %s81 = sphi 0, %s67
    %s87 = sphi 0, %s89
    %s90 = sphi 0, %s87
    %s91 = sphi 0, %s90
    %s107 = sphi 0, %s91
  $region4: #{lapirn_forward.5} parent=0 // loop_header_branch
    %12 = sbr.rel (%p10) target = $region8
  $region5: #{lapirn_forward.5} parent=0 // loop_body
    %s14 = ssub.s32 %s9, 1
    %s15 = ssub.s32 %s9, 2
    %s16 = sadd.s32 %s9, 1
    %s18 = sadd.s32 %s17, 1
    %p21 = scmp.eq.s32.totalorder %s9, 1
    %p22 = scmp.ne.s32.totalorder %s17, %s19
    %p23 = scmp.eq.s32.totalorder %s9, 0
    %p24 = por %p22, %p23
    %p25 = scmp.ne.s32.totalorder %s17, %s19
    %p26 = scmp.eq.s32.totalorder %s14, 1
    %p27 = por %p25, %p26
    %p28 = scmp.ne.s32.totalorder %s19, %s20
    %p29 = scmp.eq.s32.totalorder %s14, 0
    %p30 = por %p28, %p29
    %p31 = scmp.ne.s32.totalorder %s19, %s20
    %p32 = scmp.eq.s32.totalorder %s15, 1
    %p33 = por %p31, %p32
    %p35 = scmp.ne.s32.totalorder %s20, %s34
    %p36 = scmp.eq.s32.totalorder %s15, 0
    %p37 = por %p35, %p36
    %s38 = ssub.s32 %s9, %s16
    %p39 = scmp.eq.s32.totalorder %s38, 0
    %s41 = sadd.s32 %s40, 1
    %s42 = scalar_select %p39, %s40, %s41
    %p45 = pneg %p39
    %p46 = scmp.eq.s32.totalorder %s9, 1
    %p47 = por %p45, %p46
    %p48 = scmp.ne.s32.totalorder %s40, %s43
    %p49 = scmp.eq.s32.totalorder %s9, 0
    %p50 = por %p48, %p49
    %p51 = scmp.ne.s32.totalorder %s40, %s43
    %p52 = scmp.eq.s32.totalorder %s14, 1
    %p53 = por %p51, %p52
    %p54 = scmp.ne.s32.totalorder %s43, %s44
    %p55 = scmp.eq.s32.totalorder %s14, 0
    %p56 = por %p54, %p55
    %p57 = scmp.ne.s32.totalorder %s43, %s44
    %p58 = scmp.eq.s32.totalorder %s15, 1
    %p59 = por %p57, %p58
    %p61 = scmp.ne.s32.totalorder %s44, %s60
    %p62 = scmp.eq.s32.totalorder %s15, 0
    %p63 = por %p61, %p62
    %s65 = sadd.s32 %s64, 1
    %p68 = scmp.eq.s32.totalorder %s9, 1
    %p69 = scmp.ne.s32.totalorder %s64, %s66
    %p70 = scmp.eq.s32.totalorder %s9, 0
    %p71 = por %p69, %p70
    %p72 = scmp.ne.s32.totalorder %s64, %s66
    %p73 = scmp.eq.s32.totalorder %s14, 1
    %p74 = por %p72, %p73
    %p75 = scmp.ne.s32.totalorder %s66, %s67
    %p76 = scmp.eq.s32.totalorder %s14, 0
    %p77 = por %p75, %p76
    %p78 = scmp.ne.s32.totalorder %s66, %s67
    %p79 = scmp.eq.s32.totalorder %s15, 1
    %p80 = por %p78, %p79
    %p82 = scmp.ne.s32.totalorder %s67, %s81
    %p83 = scmp.eq.s32.totalorder %s15, 0
    %p84 = por %p82, %p83
    %s85 = ssub.s32 %s9, %s16
    %p86 = scmp.eq.s32.totalorder %s85, 0
    %s88 = sadd.s32 %s87, 1
    %s89 = scalar_select %p86, %s87, %s88
    %p92 = pneg %p86
    %p93 = scmp.eq.s32.totalorder %s9, 1
    %p94 = por %p92, %p93
    %p95 = scmp.ne.s32.totalorder %s87, %s90
    %p96 = scmp.eq.s32.totalorder %s9, 0
    %p97 = por %p95, %p96
    %p98 = scmp.ne.s32.totalorder %s87, %s90
    %p99 = scmp.eq.s32.totalorder %s14, 1
    %p100 = por %p98, %p99
    %p101 = scmp.ne.s32.totalorder %s90, %s91
    %p102 = scmp.eq.s32.totalorder %s14, 0
    %p103 = por %p101, %p102
    %p104 = scmp.ne.s32.totalorder %s90, %s91
    %p105 = scmp.eq.s32.totalorder %s15, 1
    %p106 = por %p104, %p105
    %p108 = scmp.ne.s32.totalorder %s91, %s107
    %p109 = scmp.eq.s32.totalorder %s15, 0
    %p110 = por %p108, %p109
    %p111 = scmp.le.s32.totalorder 1, %s9
    %p112 = scmp.lt.s32.totalorder %s9, 3
    %p113 = pnand %p111, %p112
    %p114 = pneg %p113
    // Predicated region
    $region9: #{lapirn_forward.5} parent=5 // pred_check
      _
    $region10: #{lapirn_forward.5} parent=5 // pred_check_branch
      %116 = sbr.rel (%p113) target = $region12
    $region11: #{lapirn_forward.5} parent=5 // pred_region
      %s117 = ssub.s32 %s9, 1
      // Predicated region
      $region13: #{lapirn_forward.5} parent=11 // pred_check
        %p118 = pneg %p30
      $region14: #{lapirn_forward.5} parent=11 // pred_check_branch
        %120 = sbr.rel (%p118) target = $region16
      $region15: #{lapirn_forward.5} parent=11 // pred_region
        _
      $region16: #{lapirn_forward.5} parent=11 // pred_fallthru
        _
      // Predicated region
      $region17: #{lapirn_forward.5} parent=11 // pred_check
        %p121 = pneg %p77
      $region18: #{lapirn_forward.5} parent=11 // pred_check_branch
        %123 = sbr.rel (%p121) target = $region20
      $region19: #{lapirn_forward.5} parent=11 // pred_region
        _
      $region20: #{lapirn_forward.5} parent=11 // pred_fallthru
        _
    $region12: #{lapirn_forward.5} parent=5 // pred_fallthru
      _
    %p124 = scmp.lt.s32.totalorder %s9, 2
    // Predicated region
    $region21: #{lapirn_forward.5} parent=5 // pred_check
      %p125 = pneg %p124
    $region22: #{lapirn_forward.5} parent=5 // pred_check_branch
      %127 = sbr.rel (%p125) target = $region24
    $region23: #{lapirn_forward.5} parent=5 // pred_region
      // Predicated region
      $region25: #{lapirn_forward.5} parent=23 // pred_check
        %p128 = pneg %p50
      $region26: #{lapirn_forward.5} parent=23 // pred_check_branch
        %130 = sbr.rel (%p128) target = $region28
      $region27: #{lapirn_forward.5} parent=23 // pred_region
        %p131 = scmp.lt.s32.totalorder %s9, 1
        %s132 = scalar_select %p131, %s9, 1
        %s133 = smul.addr %s132, 4
        %s134 = scalar_lea.vmem %s1, %s133
      $region28: #{lapirn_forward.5} parent=23 // pred_fallthru
        _
    $region24: #{lapirn_forward.5} parent=5 // pred_fallthru
      _
    %p135 = scmp.le.s32.totalorder 1, %s9
    %p136 = scmp.lt.s32.totalorder %s9, 3
    %p137 = pnand %p135, %p136
    %p138 = pneg %p137
    // Predicated region
    $region29: #{lapirn_forward.5} parent=5 // pred_check
      _
    $region30: #{lapirn_forward.5} parent=5 // pred_check_branch
      %140 = sbr.rel (%p137) target = $region32
    $region31: #{lapirn_forward.5} parent=5 // pred_region
      %s141 = ssub.s32 %s9, 1
      %p142 = pneg %p30
      %p143 = pneg %p27
      %p144 = scmp.lt.s32.totalorder %s14, 1
      %s145 = scalar_select %p144, %s14, 1
      %s146 = smul.addr %s145, 4
      %s147 = scalar_lea.vmem %s1, %s146
      %p148 = pneg %p56
      %p149 = pneg %p53
      %p150 = pneg %p77
      %p151 = pneg %p74
      %p152 = pneg %p103
      %p153 = pneg %p100
      %p154 = scmp.lt.s32.totalorder %s14, 1
      %s155 = scalar_select %p154, %s14, 1
      %s156 = smul.addr %s155, 2
      %s157 = smul.addr %s156, 4
      %s158 = scalar_lea.vmem %s3, %s157
      %p159 = scmp.lt.s32.totalorder %s14, 1
      %s160 = scalar_select %p159, %s14, 1
      %s161 = smul.addr %s160, 4
      %s162 = scalar_lea.vmem %s1, %s161
      %p163 = scmp.lt.s32.totalorder %s14, 1
      %s164 = scalar_select %p163, %s14, 1
      %s165 = smul.addr %s164, 2
      %s166 = smul.addr %s165, 4
      %s167 = scalar_lea.vmem %s3, %s166
      %v169 = vld [vmem:[%s162] sm:$0xf]
      %v170 = vld [vmem:[%s0] sm:$0xf]
      %v171 = vld [vmem:[%s0 + $0x4] sm:$0xf]
      %s172 = scalar_lea.vmem %s0, 8
      %v173 = vld [vmem:[%s172] sm:$0xf]
      %v174 = vld [vmem:[%s172 + $0x4] sm:$0xf]
      %v177 = vunpack.c.l.b16 %v173
      %v178 = vunpack.c.l.b16 %v174
      %v179 = vpack.c.b16 %v178, %v177
      %v181 = vunpack.c.l.b16 %v169
      %v182 = vpack.c.b16 %v181, %v181
      %183 = vrot.lane.b32.xlu0 %v182, 127
      %v184 = vpop.permute.xlu0 %183
      %vm185 = vcmask 64512
      %v187 = vsel %vm185, %v179, 0
      %vm189 = vcmask 1043456
      %v191 = vsel %vm189, %v184, 0
      %193 = vmatprep.subr.bf16.mxu0 0
      %194 = vmatpush1.bf16.msra.mxu0 %v191
      %195 = vmatprep.subr.bf16.mxu0 0
      %196 = vmatpush1.bf16.msra.mxu0 0
      %197 = vmatprep.subr.bf16.mxu0 0
      %198 = vmatpush1.bf16.msra.mxu0 0
      %199 = vmatprep.subr.bf16.mxu0 0
      %200 = vmatpush1.bf16.msra.mxu0 0
      %201 = vmatprep.subr.bf16.mxu0 0
      %202 = vmatpush1.bf16.msra.mxu0 0
      %203 = vmatprep.subr.bf16.mxu0 0
      %204 = vmatpush1.bf16.msra.mxu0 0
      %205 = vmatprep.subr.bf16.mxu0 0
      %206 = vmatpush1.bf16.msra.mxu0 0
      %207 = vmatprep.subr.bf16.mxu0 0
      %208 = vmatpush1.bf16.msra.mxu0 0
      %209 = vmatprep.subr.bf16.mxu0 0
      %210 = vmatpush1.bf16.msra.mxu0 0
      %211 = vmatprep.subr.bf16.mxu0 0
      %212 = vmatpush1.bf16.msra.mxu0 0
      %213 = vmatprep.subr.bf16.mxu0 0
      %214 = vmatpush1.bf16.msra.mxu0 0
      %215 = vmatprep.subr.bf16.mxu0 0
      %216 = vmatpush1.bf16.msra.mxu0 0
      %217 = vmatprep.subr.bf16.mxu0 0
      %218 = vmatpush1.bf16.msra.mxu0 0
      %219 = vmatprep.subr.bf16.mxu0 0
      %220 = vmatpush1.bf16.msra.mxu0 0
      %221 = vmatprep.subr.bf16.mxu0 0
      %222 = vmatpush1.bf16.msra.mxu0 0
      %223 = vmatprep.subr.bf16.mxu0 0
      %224 = vmatpush1.bf16.msra.mxu0 0
      %225 = vmatprep.mubr.bf16.mxu0 0
      %226 = vmatmul.mubr.bf16.gmra.mrb[0].mxu0 %v187
      %v227 = vpop.f32.mrb[0].mxu0
      %v228 = vadd.f32 0.0, %v227
      %v229 = vpop.f32.mrb[0].mxu0
      %v230 = vpop.f32.mrb[0].mxu0
      %v231 = vadd.f32 0.0, %v230
      %v232 = vpop.f32.mrb[0].mxu0
      %233 = vdwg.mxu0
      %v236 = vunpack.c.l.b16 %v170
      %v237 = vunpack.c.l.b16 %v171
      %v238 = vpack.c.b16 %v237, %v236
      %v240 = vsel %vm185, %v238, 0
      %v243 = vsel %vm189, %v169, 0
      %245 = vmatprep.subr.bf16.mxu0 0
      %246 = vmatpush1.bf16.msra.mxu0 %v243
      %247 = vmatprep.subr.bf16.mxu0 0
      %248 = vmatpush1.bf16.msra.mxu0 0
      %249 = vmatprep.subr.bf16.mxu0 0
      %250 = vmatpush1.bf16.msra.mxu0 0
      %251 = vmatprep.subr.bf16.mxu0 0
      %252 = vmatpush1.bf16.msra.mxu0 0
      %253 = vmatprep.subr.bf16.mxu0 0
      %254 = vmatpush1.bf16.msra.mxu0 0
      %255 = vmatprep.subr.bf16.mxu0 0
      %256 = vmatpush1.bf16.msra.mxu0 0
      %257 = vmatprep.subr.bf16.mxu0 0
      %258 = vmatpush1.bf16.msra.mxu0 0
      %259 = vmatprep.subr.bf16.mxu0 0
      %260 = vmatpush1.bf16.msra.mxu0 0
      %261 = vmatprep.subr.bf16.mxu0 0
      %262 = vmatpush1.bf16.msra.mxu0 0
      %263 = vmatprep.subr.bf16.mxu0 0
      %264 = vmatpush1.bf16.msra.mxu0 0
      %265 = vmatprep.subr.bf16.mxu0 0
      %266 = vmatpush1.bf16.msra.mxu0 0
      %267 = vmatprep.subr.bf16.mxu0 0
      %268 = vmatpush1.bf16.msra.mxu0 0
      %269 = vmatprep.subr.bf16.mxu0 0
      %270 = vmatpush1.bf16.msra.mxu0 0
      %271 = vmatprep.subr.bf16.mxu0 0
      %272 = vmatpush1.bf16.msra.mxu0 0
      %273 = vmatprep.subr.bf16.mxu0 0
      %274 = vmatpush1.bf16.msra.mxu0 0
      %275 = vmatprep.subr.bf16.mxu0 0
      %276 = vmatpush1.bf16.msra.mxu0 0
      %277 = vmatprep.mubr.bf16.mxu0 0
      %278 = vmatmul.mubr.bf16.gmra.mrb[0].mxu0 %v240
      %v279 = vpop.f32.mrb[0].mxu0
      %v280 = vadd.f32 %v228, %v279
      %v281 = vpop.f32.mrb[0].mxu0
      %v282 = vpop.f32.mrb[0].mxu0
      %v283 = vadd.f32 %v231, %v282
      %v284 = vpop.f32.mrb[0].mxu0
      %285 = vdwg.mxu0
      %s286 = scalar_lea.vmem %s0, 16
      %v287 = vld [vmem:[%s286] sm:$0xf]
      %v288 = vld [vmem:[%s286 + $0x4] sm:$0xf]
      %v291 = vunpack.c.l.b16 %v287
      %v292 = vunpack.c.l.b16 %v288
      %v293 = vpack.c.b16 %v292, %v291
      %294 = vrot.lane.b32.xlu0 %v182, 119
      %v295 = vpop.permute.xlu0 %294
      %v297 = vsel %vm185, %v293, 0
      %v300 = vsel %vm189, %v295, 0
      %302 = vmatprep.subr.bf16.mxu0 0
      %303 = vmatpush1.bf16.msra.mxu0 %v300
      %304 = vmatprep.subr.bf16.mxu0 0
      %305 = vmatpush1.bf16.msra.mxu0 0
      %306 = vmatprep.subr.bf16.mxu0 0
      %307 = vmatpush1.bf16.msra.mxu0 0
      %308 = vmatprep.subr.bf16.mxu0 0
      %309 = vmatpush1.bf16.msra.mxu0 0
      %310 = vmatprep.subr.bf16.mxu0 0
      %311 = vmatpush1.bf16.msra.mxu0 0
      %312 = vmatprep.subr.bf16.mxu0 0
      %313 = vmatpush1.bf16.msra.mxu0 0
      %314 = vmatprep.subr.bf16.mxu0 0
      %315 = vmatpush1.bf16.msra.mxu0 0
      %316 = vmatprep.subr.bf16.mxu0 0
      %317 = vmatpush1.bf16.msra.mxu0 0
      %318 = vmatprep.subr.bf16.mxu0 0
      %319 = vmatpush1.bf16.msra.mxu0 0
      %320 = vmatprep.subr.bf16.mxu0 0
      %321 = vmatpush1.bf16.msra.mxu0 0
      %322 = vmatprep.subr.bf16.mxu0 0
      %323 = vmatpush1.bf16.msra.mxu0 0
      %324 = vmatprep.subr.bf16.mxu0 0
      %325 = vmatpush1.bf16.msra.mxu0 0
      %326 = vmatprep.subr.bf16.mxu0 0
      %327 = vmatpush1.bf16.msra.mxu0 0
      %328 = vmatprep.subr.bf16.mxu0 0
      %329 = vmatpush1.bf16.msra.mxu0 0
      %330 = vmatprep.subr.bf16.mxu0 0
      %331 = vmatpush1.bf16.msra.mxu0 0
      %332 = vmatprep.subr.bf16.mxu0 0
      %333 = vmatpush1.bf16.msra.mxu0 0
      %334 = vmatprep.mubr.bf16.mxu0 0
      %335 = vmatmul.mubr.bf16.gmra.mrb[0].mxu0 %v297
      %v336 = vpop.f32.mrb[0].mxu0
      %v337 = vadd.f32 0.0, %v336
      %v338 = vpop.f32.mrb[0].mxu0
      %v339 = vpop.f32.mrb[0].mxu0
      %v340 = vadd.f32 0.0, %v339
      %v341 = vpop.f32.mrb[0].mxu0
      %342 = vdwg.mxu0
      %v343 = vadd.f32 %v280, %v337
      %v344 = vadd.f32 %v283, %v340
      %s345 = scalar_lea.vmem %s0, 24
      %v346 = vld [vmem:[%s345] sm:$0xf]
      %v347 = vld [vmem:[%s345 + $0x4] sm:$0xf]
      %v350 = vunpack.c.l.b16 %v346
      %v351 = vunpack.c.l.b16 %v347
      %v352 = vpack.c.b16 %v351, %v350
      %353 = vrot.lane.b32.xlu0 %v182, 118
      %v354 = vpop.permute.xlu0 %353
      %v356 = vsel %vm185, %v352, 0
      %v359 = vsel %vm189, %v354, 0
      %361 = vmatprep.subr.bf16.mxu0 0
      %362 = vmatpush1.bf16.msra.mxu0 %v359
      %363 = vmatprep.subr.bf16.mxu0 0
      %364 = vmatpush1.bf16.msra.mxu0 0
      %365 = vmatprep.subr.bf16.mxu0 0
      %366 = vmatpush1.bf16.msra.mxu0 0
      %367 = vmatprep.subr.bf16.mxu0 0
      %368 = vmatpush1.bf16.msra.mxu0 0
      %369 = vmatprep.subr.bf16.mxu0 0
      %370 = vmatpush1.bf16.msra.mxu0 0
      %371 = vmatprep.subr.bf16.mxu0 0
      %372 = vmatpush1.bf16.msra.mxu0 0
      %373 = vmatprep.subr.bf16.mxu0 0
      %374 = vmatpush1.bf16.msra.mxu0 0
      %375 = vmatprep.subr.bf16.mxu0 0
      %376 = vmatpush1.bf16.msra.mxu0 0
      %377 = vmatprep.subr.bf16.mxu0 0
      %378 = vmatpush1.bf16.msra.mxu0 0
      %379 = vmatprep.subr.bf16.mxu0 0
      %380 = vmatpush1.bf16.msra.mxu0 0
      %381 = vmatprep.subr.bf16.mxu0 0
      %382 = vmatpush1.bf16.msra.mxu0 0
      %383 = vmatprep.subr.bf16.mxu0 0
      %384 = vmatpush1.bf16.msra.mxu0 0
      %385 = vmatprep.subr.bf16.mxu0 0
      %386 = vmatpush1.bf16.msra.mxu0 0
      %387 = vmatprep.subr.bf16.mxu0 0
      %388 = vmatpush1.bf16.msra.mxu0 0
      %389 = vmatprep.subr.bf16.mxu0 0
      %390 = vmatpush1.bf16.msra.mxu0 0
      %391 = vmatprep.subr.bf16.mxu0 0
      %392 = vmatpush1.bf16.msra.mxu0 0
      %393 = vmatprep.mubr.bf16.mxu0 0
      %394 = vmatmul.mubr.bf16.gmra.mrb[0].mxu0 %v356
      %v395 = vpop.f32.mrb[0].mxu0
      %v396 = vadd.f32 0.0, %v395
      %v397 = vpop.f32.mrb[0].mxu0
      %v398 = vpop.f32.mrb[0].mxu0
      %v399 = vadd.f32 0.0, %v398
      %v400 = vpop.f32.mrb[0].mxu0
      %401 = vdwg.mxu0
      %v402 = vadd.f32 %v343, %v396
      %v403 = vadd.f32 %v344, %v399
      %v404 = vld [vmem:[%s2] sm:$0xff]
      %v405 = vld [vmem:[%s2 + $0x8] sm:$0xff]
      %407 = vset.pattern.permute.xlu0 0
      %408 = vperm.xlu0 %407, %v404
      %v409 = vpop.permute.xlu0 %408
      %412 = vset.pattern.permute.xlu0 0
      %413 = vperm.xlu0 %412, %v405
      %v414 = vpop.permute.xlu0 %413
      %v416 = vadd.f32 %v402, %v409
      %v417 = vadd.f32 %v403, %v414
      %vm418 = vcmp.ge.f32.partialorder %v416, 0.0
      %vm419 = vcmp.ge.f32.partialorder %v417, 0.0
      %v420 = vmul.f32 %v416, 0.2
      %v421 = vmul.f32 %v417, 0.2
      %v422 = vsel %vm418, %v416, %v420
      %v423 = vsel %vm419, %v417, %v421
      %v424 = vpack.c.bf16 %v423, %v422
      %v426 = vunpack.c.l.b16 %v424
      %v427 = vunpack.c.h.b16 %v424
      %v428 = vpack.c.b16 %v426, %v426
      %v429 = vpack.c.b16 %v427, %v427
      %vm432 = vcmask 584704
      %433 = vst.msk [vmem:[%s167] sm:$0xf] %vm432, %v428
      %434 = vst.msk [vmem:[%s167 + $0x4] sm:$0xf] %vm432, %v429
      %p435 = scmp.lt.s32.totalorder %s14, 1
      %s436 = scalar_select %p435, %s14, 1
      %s437 = smul.addr %s436, 2
      %s438 = smul.addr %s437, 4
      %s439 = scalar_lea.vmem %s3, %s438
      // Predicated region
      $region33: #{lapirn_forward.5} parent=31 // pred_check
        %p440 = pneg %p100
      $region34: #{lapirn_forward.5} parent=31 // pred_check_branch
        %442 = sbr.rel (%p440) target = $region36
      $region35: #{lapirn_forward.5} parent=31 // pred_region
        _
      $region36: #{lapirn_forward.5} parent=31 // pred_fallthru
        _
    $region32: #{lapirn_forward.5} parent=5 // pred_fallthru
      _
    %p443 = scmp.le.s32.totalorder 2, %s9
    // Predicated region
    $region37: #{lapirn_forward.5} parent=5 // pred_check
      %p444 = pneg %p443
    $region38: #{lapirn_forward.5} parent=5 // pred_check_branch
      %446 = sbr.rel (%p444) target = $region40
    $region39: #{lapirn_forward.5} parent=5 // pred_region
      %s447 = ssub.s32 %s9, 2
      // Predicated region
      $region41: #{lapirn_forward.5} parent=39 // pred_check
        %p448 = pneg %p106
      $region42: #{lapirn_forward.5} parent=39 // pred_check_branch
        %450 = sbr.rel (%p448) target = $region44
      $region43: #{lapirn_forward.5} parent=39 // pred_region
        %p451 = scmp.lt.s32.totalorder %s15, 1
        %s452 = scalar_select %p451, %s15, 1
        %s453 = smul.addr %s452, 2
        %s454 = smul.addr %s453, 4
        %s455 = scalar_lea.vmem %s3, %s454
      $region44: #{lapirn_forward.5} parent=39 // pred_fallthru
        _
    $region40: #{lapirn_forward.5} parent=5 // pred_fallthru
      _
  $region6: #{lapirn_forward.5} parent=0 // loop_footer
    %s13 = sadd.s32 1, %s9
  $region7: #{lapirn_forward.5} parent=0 // loop_footer_branch
    %8 = sbr.rel target = $region3
  $region8: #{lapirn_forward.5} parent=0 // loop_exit
    _

// kernel: lapirn_forward.6
$region0: #{lapirn_forward.6}
  #allocation0 [shape = 'u32[]', space=smem, size = 0x4, offset = 0x4, fixed_abs, tag = 'smem constant byte address 0x4 - core index']
  #allocation1 [shape = 'u32[144,128]{1,0:T(1,128)}', space=vmem, size = 0x12000, scoped, tag = 'internal scratch']
  %s0 = inlined_call_operand.vmem [shape: bf16[4,32,64], index: 0, kind: input, shape index: {}]
  %s1 = inlined_call_operand.vmem [shape: bf16[2,64,26], index: 1, kind: input, shape index: {}]
  %s2 = inlined_call_operand.vmem [shape: f32[32,1], index: 2, kind: input, shape index: {}]
  %s3 = inlined_call_operand.vmem [shape: bf16[2,32,20], index: 3, kind: output, shape index: {}]
  %s4 = sld [smem:[#allocation0]]
  $region45: #{lapirn_forward.6} parent=0
    _
  %s6 = ssub.s32 1, %s4
  %s7 = scalar_select 0, %s6, %s4
  loop: start=0, step=1, limit=4
  $region2: #{lapirn_forward.6} parent=0 // loop_pre_header
    _
  $region3: #{lapirn_forward.6} parent=0 // loop_header
    %s9 = sphi 0, %s13
    %p10 = scmp.ge.s32.totalorder %s9, 4
    %s17 = sphi 0, %s17
    %s19 = sphi 0, %s17
    %s20 = sphi 0, %s19
    %s34 = sphi 0, %s20
    %s40 = sphi 0, %s42
    %s43 = sphi 0, %s40
    %s44 = sphi 0, %s43
    %s60 = sphi 0, %s44
    %s64 = sphi 0, %s64
    %s66 = sphi 0, %s64
    %s67 = sphi 0, %s66
    %s81 = sphi 0, %s67
    %s87 = sphi 0, %s89
    %s90 = sphi 0, %s87
    %s91 = sphi 0, %s90
    %s107 = sphi 0, %s91
  $region4: #{lapirn_forward.6} parent=0 // loop_header_branch
    %12 = sbr.rel (%p10) target = $region8
  $region5: #{lapirn_forward.6} parent=0 // loop_body
    %s14 = ssub.s32 %s9, 1
    %s15 = ssub.s32 %s9, 2
    %s16 = sadd.s32 %s9, 1
    %s18 = sadd.s32 %s17, 1
    %p21 = scmp.eq.s32.totalorder %s9, 1
    %p22 = scmp.ne.s32.totalorder %s17, %s19
    %p23 = scmp.eq.s32.totalorder %s9, 0
    %p24 = por %p22, %p23
    %p25 = scmp.ne.s32.totalorder %s17, %s19
    %p26 = scmp.eq.s32.totalorder %s14, 1
    %p27 = por %p25, %p26
    %p28 = scmp.ne.s32.totalorder %s19, %s20
    %p29 = scmp.eq.s32.totalorder %s14, 0
    %p30 = por %p28, %p29
    %p31 = scmp.ne.s32.totalorder %s19, %s20
    %p32 = scmp.eq.s32.totalorder %s15, 1
    %p33 = por %p31, %p32
    %p35 = scmp.ne.s32.totalorder %s20, %s34
    %p36 = scmp.eq.s32.totalorder %s15, 0
    %p37 = por %p35, %p36
    %s38 = ssub.s32 %s9, %s16
    %p39 = scmp.eq.s32.totalorder %s38, 0
    %s41 = sadd.s32 %s40, 1
    %s42 = scalar_select %p39, %s40, %s41
    %p45 = pneg %p39
    %p46 = scmp.eq.s32.totalorder %s9, 1
    %p47 = por %p45, %p46
    %p48 = scmp.ne.s32.totalorder %s40, %s43
    %p49 = scmp.eq.s32.totalorder %s9, 0
    %p50 = por %p48, %p49
    %p51 = scmp.ne.s32.totalorder %s40, %s43
    %p52 = scmp.eq.s32.totalorder %s14, 1
    %p53 = por %p51, %p52
    %p54 = scmp.ne.s32.totalorder %s43, %s44
    %p55 = scmp.eq.s32.totalorder %s14, 0
    %p56 = por %p54, %p55
    %p57 = scmp.ne.s32.totalorder %s43, %s44
    %p58 = scmp.eq.s32.totalorder %s15, 1
    %p59 = por %p57, %p58
    %p61 = scmp.ne.s32.totalorder %s44, %s60
    %p62 = scmp.eq.s32.totalorder %s15, 0
    %p63 = por %p61, %p62
    %s65 = sadd.s32 %s64, 1
    %p68 = scmp.eq.s32.totalorder %s9, 1
    %p69 = scmp.ne.s32.totalorder %s64, %s66
    %p70 = scmp.eq.s32.totalorder %s9, 0
    %p71 = por %p69, %p70
    %p72 = scmp.ne.s32.totalorder %s64, %s66
    %p73 = scmp.eq.s32.totalorder %s14, 1
    %p74 = por %p72, %p73
    %p75 = scmp.ne.s32.totalorder %s66, %s67
    %p76 = scmp.eq.s32.totalorder %s14, 0
    %p77 = por %p75, %p76
    %p78 = scmp.ne.s32.totalorder %s66, %s67
    %p79 = scmp.eq.s32.totalorder %s15, 1
    %p80 = por %p78, %p79
    %p82 = scmp.ne.s32.totalorder %s67, %s81
    %p83 = scmp.eq.s32.totalorder %s15, 0
    %p84 = por %p82, %p83
    %s85 = ssub.s32 %s9, %s16
    %p86 = scmp.eq.s32.totalorder %s85, 0
    %s88 = sadd.s32 %s87, 1
    %s89 = scalar_select %p86, %s87, %s88
    %p92 = pneg %p86
    %p93 = scmp.eq.s32.totalorder %s9, 1
    %p94 = por %p92, %p93
    %p95 = scmp.ne.s32.totalorder %s87, %s90
    %p96 = scmp.eq.s32.totalorder %s9, 0
    %p97 = por %p95, %p96
    %p98 = scmp.ne.s32.totalorder %s87, %s90
    %p99 = scmp.eq.s32.totalorder %s14, 1
    %p100 = por %p98, %p99
    %p101 = scmp.ne.s32.totalorder %s90, %s91
    %p102 = scmp.eq.s32.totalorder %s14, 0
    %p103 = por %p101, %p102
    %p104 = scmp.ne.s32.totalorder %s90, %s91
    %p105 = scmp.eq.s32.totalorder %s15, 1
    %p106 = por %p104, %p105
    %p108 = scmp.ne.s32.totalorder %s91, %s107
    %p109 = scmp.eq.s32.totalorder %s15, 0
    %p110 = por %p108, %p109
    %p111 = scmp.le.s32.totalorder 1, %s9
    %p112 = scmp.lt.s32.totalorder %s9, 3
    %p113 = pnand %p111, %p112
    %p114 = pneg %p113
    // Predicated region
    $region9: #{lapirn_forward.6} parent=5 // pred_check
      _
    $region10: #{lapirn_forward.6} parent=5 // pred_check_branch
      %116 = sbr.rel (%p113) target = $region12
    $region11: #{lapirn_forward.6} parent=5 // pred_region
      %s117 = ssub.s32 %s9, 1
      // Predicated region
      $region13: #{lapirn_forward.6} parent=11 // pred_check
        %p118 = pneg %p30
      $region14: #{lapirn_forward.6} parent=11 // pred_check_branch
        %120 = sbr.rel (%p118) target = $region16
      $region15: #{lapirn_forward.6} parent=11 // pred_region
        _
      $region16: #{lapirn_forward.6} parent=11 // pred_fallthru
        _
      // Predicated region
      $region17: #{lapirn_forward.6} parent=11 // pred_check
        %p121 = pneg %p77
      $region18: #{lapirn_forward.6} parent=11 // pred_check_branch
        %123 = sbr.rel (%p121) target = $region20
      $region19: #{lapirn_forward.6} parent=11 // pred_region
        _
      $region20: #{lapirn_forward.6} parent=11 // pred_fallthru
        _
    $region12: #{lapirn_forward.6} parent=5 // pred_fallthru
      _
    %p124 = scmp.lt.s32.totalorder %s9, 2
    // Predicated region
    $region21: #{lapirn_forward.6} parent=5 // pred_check
      %p125 = pneg %p124
    $region22: #{lapirn_forward.6} parent=5 // pred_check_branch
      %127 = sbr.rel (%p125) target = $region24
    $region23: #{lapirn_forward.6} parent=5 // pred_region
      // Predicated region
      $region25: #{lapirn_forward.6} parent=23 // pred_check
        %p128 = pneg %p50
      $region26: #{lapirn_forward.6} parent=23 // pred_check_branch
        %130 = sbr.rel (%p128) target = $region28
      $region27: #{lapirn_forward.6} parent=23 // pred_region
        %p131 = scmp.lt.s32.totalorder %s9, 1
        %s132 = scalar_select %p131, %s9, 1
        %s133 = smul.addr %s132, 8
        %s134 = smul.addr %s133, 4
        %s135 = scalar_lea.vmem %s1, %s134
      $region28: #{lapirn_forward.6} parent=23 // pred_fallthru
        _
    $region24: #{lapirn_forward.6} parent=5 // pred_fallthru
      _
    %p136 = scmp.le.s32.totalorder 1, %s9
    %p137 = scmp.lt.s32.totalorder %s9, 3
    %p138 = pnand %p136, %p137
    %p139 = pneg %p138
    // Predicated region
    $region29: #{lapirn_forward.6} parent=5 // pred_check
      _
    $region30: #{lapirn_forward.6} parent=5 // pred_check_branch
      %141 = sbr.rel (%p138) target = $region32
    $region31: #{lapirn_forward.6} parent=5 // pred_region
      %s142 = ssub.s32 %s9, 1
      %p143 = pneg %p30
      %p144 = pneg %p27
      %p145 = scmp.lt.s32.totalorder %s14, 1
      %s146 = scalar_select %p145, %s14, 1
      %s147 = smul.addr %s146, 8
      %s148 = smul.addr %s147, 4
      %s149 = scalar_lea.vmem %s1, %s148
      %p150 = pneg %p56
      %p151 = pneg %p53
      %p152 = pneg %p77
      %p153 = pneg %p74
      %p154 = pneg %p103
      %p155 = pneg %p100
      %p156 = scmp.lt.s32.totalorder %s14, 1
      %s157 = scalar_select %p156, %s14, 1
      %s158 = smul.addr %s157, 4
      %s159 = smul.addr %s158, 4
      %s160 = scalar_lea.vmem %s3, %s159
      %p161 = scmp.lt.s32.totalorder %s14, 1
      %s162 = scalar_select %p161, %s14, 1
      %s163 = smul.addr %s162, 8
      %s164 = smul.addr %s163, 4
      %s165 = scalar_lea.vmem %s1, %s164
      %p166 = scmp.lt.s32.totalorder %s14, 1
      %s167 = scalar_select %p166, %s14, 1
      %s168 = smul.addr %s167, 4
      %s169 = smul.addr %s168, 4
      %s170 = scalar_lea.vmem %s3, %s169
      %v172 = vld [vmem:[%s165] sm:$0xf]
      %v173 = vld [vmem:[%s165 + $0x4] sm:$0xf]
      %v174 = vld [vmem:[%s165 + $0x8] sm:$0xf]
      %v175 = vld [vmem:[%s165 + $0xc] sm:$0xf]
      %v176 = vld [vmem:[%s165 + $0x10] sm:$0xf]
      %v177 = vld [vmem:[%s165 + $0x14] sm:$0xf]
      %v178 = vld [vmem:[%s165 + $0x18] sm:$0xf]
      %v179 = vld [vmem:[%s165 + $0x1c] sm:$0xf]
      %v180 = vld [vmem:[%s0] sm:$0xf]
      %v181 = vld [vmem:[%s0 + $0x4] sm:$0xf]
      %v182 = vld [vmem:[%s0 + $0x8] sm:$0xf]
      %v183 = vld [vmem:[%s0 + $0xc] sm:$0xf]
      %s184 = scalar_lea.vmem %s0, 16
      %v185 = vld [vmem:[%s184] sm:$0xf]
      %v186 = vld [vmem:[%s184 + $0x4] sm:$0xf]
      %v187 = vld [vmem:[%s184 + $0x8] sm:$0xf]
      %v188 = vld [vmem:[%s184 + $0xc] sm:$0xf]
      %v193 = vunpack.c.l.b16 %v185
      %v194 = vunpack.c.l.b16 %v186
      %v195 = vunpack.c.l.b16 %v187
      %v196 = vunpack.c.l.b16 %v188
      %v197 = vpack.c.b16 %v194, %v193
      %v198 = vpack.c.b16 %v196, %v195
      %v207 = vunpack.c.l.b16 %v172
      %v208 = vunpack.c.l.b16 %v173
      %v209 = vunpack.c.l.b16 %v174
      %v210 = vunpack.c.l.b16 %v175
      %v211 = vunpack.c.l.b16 %v176
      %v212 = vunpack.c.l.b16 %v177
      %v213 = vunpack.c.l.b16 %v178
      %v214 = vunpack.c.l.b16 %v179
      %v215 = vpack.c.b16 %v208, %v207
      %v216 = vpack.c.b16 %v210, %v209
      %v217 = vpack.c.b16 %v212, %v211
      %v218 = vpack.c.b16 %v214, %v213
      %219 = vrot.lane.b32.xlu0 %v215, 127
      %v220 = vpop.permute.xlu0 %219
      %221 = vrot.lane.b32.xlu0 %v216, 127
      %v222 = vpop.permute.xlu0 %221
      %223 = vrot.lane.b32.xlu0 %v217, 127
      %v224 = vpop.permute.xlu0 %223
      %225 = vrot.lane.b32.xlu0 %v218, 127
      %v226 = vpop.permute.xlu0 %225
      %vm231 = vcmask 523264
      %v233 = vsel %vm231, %v197, 0
      %v236 = vsel %vm231, %v198, 0
      %238 = vmatprep.subr.bf16.mxu0 0
      %239 = vmatpush1.bf16.msra.mxu0 %v220
      %240 = vmatprep.subr.bf16.mxu0 0
      %241 = vmatpush1.bf16.msra.mxu0 %v222
      %242 = vmatprep.subr.bf16.mxu0 0
      %243 = vmatpush1.bf16.msra.mxu0 %v224
      %244 = vmatprep.subr.bf16.mxu0 0
      %245 = vmatpush1.bf16.msra.mxu0 %v226
      %246 = vmatprep.subr.bf16.mxu0 0
      %247 = vmatpush1.bf16.msra.mxu0 0
      %248 = vmatprep.subr.bf16.mxu0 0
      %249 = vmatpush1.bf16.msra.mxu0 0
      %250 = vmatprep.subr.bf16.mxu0 0
      %251 = vmatpush1.bf16.msra.mxu0 0
      %252 = vmatprep.subr.bf16.mxu0 0
      %253 = vmatpush1.bf16.msra.mxu0 0
      %254 = vmatprep.subr.bf16.mxu0 0
      %255 = vmatpush1.bf16.msra.mxu0 0
      %256 = vmatprep.subr.bf16.mxu0 0
      %257 = vmatpush1.bf16.msra.mxu0 0
      %258 = vmatprep.subr.bf16.mxu0 0
      %259 = vmatpush1.bf16.msra.mxu0 0
      %260 = vmatprep.subr.bf16.mxu0 0
      %261 = vmatpush1.bf16.msra.mxu0 0
      %262 = vmatprep.subr.bf16.mxu0 0
      %263 = vmatpush1.bf16.msra.mxu0 0
      %264 = vmatprep.subr.bf16.mxu0 0
      %265 = vmatpush1.bf16.msra.mxu0 0
      %266 = vmatprep.subr.bf16.mxu0 0
      %267 = vmatpush1.bf16.msra.mxu0 0
      %268 = vmatprep.subr.bf16.mxu0 0
      %269 = vmatpush1.bf16.msra.mxu0 0
      %270 = vmatprep.mubr.bf16.mxu0 0
      %271 = vmatmul.mubr.bf16.gmra.mrb[0].mxu0 %v233
      %v272 = vpop.f32.mrb[0].mxu0
      %v273 = vadd.f32 0.0, %v272
      %v274 = vpop.f32.mrb[0].mxu0
      %v275 = vpop.f32.mrb[0].mxu0
      %v276 = vadd.f32 0.0, %v275
      %v277 = vpop.f32.mrb[0].mxu0
      %278 = vmatprep.mubr.bf16.mxu0 0
      %279 = vmatmul.mubr.bf16.gmra.mrb[0].mxu0 %v236
      %v280 = vpop.f32.mrb[0].mxu0
      %v281 = vadd.f32 0.0, %v280
      %v282 = vpop.f32.mrb[0].mxu0
      %v283 = vpop.f32.mrb[0].mxu0
      %v284 = vadd.f32 0.0, %v283
      %v285 = vpop.f32.mrb[0].mxu0
      %286 = vdwg.mxu0
      %v291 = vunpack.c.l.b16 %v180
      %v292 = vunpack.c.l.b16 %v181
      %v293 = vunpack.c.l.b16 %v182
      %v294 = vunpack.c.l.b16 %v183
      %v295 = vpack.c.b16 %v292, %v291
      %v296 = vpack.c.b16 %v294, %v293
      %v302 = vsel %vm231, %v295, 0
      %v305 = vsel %vm231, %v296, 0
      %307 = vmatprep.subr.bf16.mxu0 0
      %308 = vmatpush1.bf16.msra.mxu0 %v215
      %309 = vmatprep.subr.bf16.mxu0 0
      %310 = vmatpush1.bf16.msra.mxu0 %v216
      %311 = vmatprep.subr.bf16.mxu0 0
      %312 = vmatpush1.bf16.msra.mxu0 %v217
      %313 = vmatprep.subr.bf16.mxu0 0
      %314 = vmatpush1.bf16.msra.mxu0 %v218
      %315 = vmatprep.subr.bf16.mxu0 0
      %316 = vmatpush1.bf16.msra.mxu0 0
      %317 = vmatprep.subr.bf16.mxu0 0
      %318 = vmatpush1.bf16.msra.mxu0 0
      %319 = vmatprep.subr.bf16.mxu0 0
      %320 = vmatpush1.bf16.msra.mxu0 0
      %321 = vmatprep.subr.bf16.mxu0 0
      %322 = vmatpush1.bf16.msra.mxu0 0
      %323 = vmatprep.subr.bf16.mxu0 0
      %324 = vmatpush1.bf16.msra.mxu0 0
      %325 = vmatprep.subr.bf16.mxu0 0
      %326 = vmatpush1.bf16.msra.mxu0 0
      %327 = vmatprep.subr.bf16.mxu0 0
      %328 = vmatpush1.bf16.msra.mxu0 0
      %329 = vmatprep.subr.bf16.mxu0 0
      %330 = vmatpush1.bf16.msra.mxu0 0
      %331 = vmatprep.subr.bf16.mxu0 0
      %332 = vmatpush1.bf16.msra.mxu0 0
      %333 = vmatprep.subr.bf16.mxu0 0
      %334 = vmatpush1.bf16.msra.mxu0 0
      %335 = vmatprep.subr.bf16.mxu0 0
      %336 = vmatpush1.bf16.msra.mxu0 0
      %337 = vmatprep.subr.bf16.mxu0 0
      %338 = vmatpush1.bf16.msra.mxu0 0
      %339 = vmatprep.mubr.bf16.mxu0 0
      %340 = vmatmul.mubr.bf16.gmra.mrb[0].mxu0 %v302
      %v341 = vpop.f32.mrb[0].mxu0
      %v342 = vadd.f32 %v273, %v341
      %v343 = vpop.f32.mrb[0].mxu0
      %v344 = vpop.f32.mrb[0].mxu0
      %v345 = vadd.f32 %v276, %v344
      %v346 = vpop.f32.mrb[0].mxu0
      %347 = vmatprep.mubr.bf16.mxu0 0
      %348 = vmatmul.mubr.bf16.gmra.mrb[0].mxu0 %v305
      %v349 = vpop.f32.mrb[0].mxu0
      %v350 = vadd.f32 %v281, %v349
      %v351 = vpop.f32.mrb[0].mxu0
      %v352 = vpop.f32.mrb[0].mxu0
      %v353 = vadd.f32 %v284, %v352
      %v354 = vpop.f32.mrb[0].mxu0
      %355 = vdwg.mxu0
      %s356 = scalar_lea.vmem %s0, 32
      %v357 = vld [vmem:[%s356] sm:$0xf]
      %v358 = vld [vmem:[%s356 + $0x4] sm:$0xf]
      %v359 = vld [vmem:[%s356 + $0x8] sm:$0xf]
      %v360 = vld [vmem:[%s356 + $0xc] sm:$0xf]
      %v365 = vunpack.c.l.b16 %v357
      %v366 = vunpack.c.l.b16 %v358
      %v367 = vunpack.c.l.b16 %v359
      %v368 = vunpack.c.l.b16 %v360
      %v369 = vpack.c.b16 %v366, %v365
      %v370 = vpack.c.b16 %v368, %v367
      %371 = vrot.lane.b32.xlu0 %v215, 123
      %v372 = vpop.permute.xlu0 %371
      %373 = vrot.lane.b32.xlu0 %v216, 123
      %v374 = vpop.permute.xlu0 %373
      %375 = vrot.lane.b32.xlu0 %v217, 123
      %v376 = vpop.permute.xlu0 %375
      %377 = vrot.lane.b32.xlu0 %v218, 123
      %v378 = vpop.permute.xlu0 %377
      %v384 = vsel %vm231, %v369, 0
      %v387 = vsel %vm231, %v370, 0
      %389 = vmatprep.subr.bf16.mxu0 0
      %390 = vmatpush1.bf16.msra.mxu0 %v372
      %391 = vmatprep.subr.bf16.mxu0 0
      %392 = vmatpush1.bf16.msra.mxu0 %v374
      %393 = vmatprep.subr.bf16.mxu0 0
      %394 = vmatpush1.bf16.msra.mxu0 %v376
      %395 = vmatprep.subr.bf16.mxu0 0
      %396 = vmatpush1.bf16.msra.mxu0 %v378
      %397 = vmatprep.subr.bf16.mxu0 0
      %398 = vmatpush1.bf16.msra.mxu0 0
      %399 = vmatprep.subr.bf16.mxu0 0
      %400 = vmatpush1.bf16.msra.mxu0 0
      %401 = vmatprep.subr.bf16.mxu0 0
      %402 = vmatpush1.bf16.msra.mxu0 0
      %403 = vmatprep.subr.bf16.mxu0 0
      %404 = vmatpush1.bf16.msra.mxu0 0
      %405 = vmatprep.subr.bf16.mxu0 0
      %406 = vmatpush1.bf16.msra.mxu0 0
      %407 = vmatprep.subr.bf16.mxu0 0
      %408 = vmatpush1.bf16.msra.mxu0 0
      %409 = vmatprep.subr.bf16.mxu0 0
      %410 = vmatpush1.bf16.msra.mxu0 0
      %411 = vmatprep.subr.bf16.mxu0 0
      %412 = vmatpush1.bf16.msra.mxu0 0
      %413 = vmatprep.subr.bf16.mxu0 0
      %414 = vmatpush1.bf16.msra.mxu0 0
      %415 = vmatprep.subr.bf16.mxu0 0
      %416 = vmatpush1.bf16.msra.mxu0 0
      %417 = vmatprep.subr.bf16.mxu0 0
      %418 = vmatpush1.bf16.msra.mxu0 0
      %419 = vmatprep.subr.bf16.mxu0 0
      %420 = vmatpush1.bf16.msra.mxu0 0
      %421 = vmatprep.mubr.bf16.mxu0 0
      %422 = vmatmul.mubr.bf16.gmra.mrb[0].mxu0 %v384
      %v423 = vpop.f32.mrb[0].mxu0
      %v424 = vadd.f32 0.0, %v423
      %v425 = vpop.f32.mrb[0].mxu0
      %v426 = vpop.f32.mrb[0].mxu0
      %v427 = vadd.f32 0.0, %v426
      %v428 = vpop.f32.mrb[0].mxu0
      %429 = vmatprep.mubr.bf16.mxu0 0
      %430 = vmatmul.mubr.bf16.gmra.mrb[0].mxu0 %v387
      %v431 = vpop.f32.mrb[0].mxu0
      %v432 = vadd.f32 0.0, %v431
      %v433 = vpop.f32.mrb[0].mxu0
      %v434 = vpop.f32.mrb[0].mxu0
      %v435 = vadd.f32 0.0, %v434
      %v436 = vpop.f32.mrb[0].mxu0
      %437 = vdwg.mxu0
      %v438 = vadd.f32 %v342, %v424
      %v439 = vadd.f32 %v345, %v427
      %v440 = vadd.f32 %v350, %v432
      %v441 = vadd.f32 %v353, %v435
      %s442 = scalar_lea.vmem %s0, 48
      %v443 = vld [vmem:[%s442] sm:$0xf]
      %v444 = vld [vmem:[%s442 + $0x4] sm:$0xf]
      %v445 = vld [vmem:[%s442 + $0x8] sm:$0xf]
      %v446 = vld [vmem:[%s442 + $0xc] sm:$0xf]
      %v451 = vunpack.c.l.b16 %v443
      %v452 = vunpack.c.l.b16 %v444
      %v453 = vunpack.c.l.b16 %v445
      %v454 = vunpack.c.l.b16 %v446
      %v455 = vpack.c.b16 %v452, %v451
      %v456 = vpack.c.b16 %v454, %v453
      %457 = vrot.lane.b32.xlu0 %v215, 122
      %v458 = vpop.permute.xlu0 %457
      %459 = vrot.lane.b32.xlu0 %v216, 122
      %v460 = vpop.permute.xlu0 %459
      %461 = vrot.lane.b32.xlu0 %v217, 122
      %v462 = vpop.permute.xlu0 %461
      %463 = vrot.lane.b32.xlu0 %v218, 122
      %v464 = vpop.permute.xlu0 %463
      %v470 = vsel %vm231, %v455, 0
      %v473 = vsel %vm231, %v456, 0
      %475 = vmatprep.subr.bf16.mxu0 0
      %476 = vmatpush1.bf16.msra.mxu0 %v458
      %477 = vmatprep.subr.bf16.mxu0 0
      %478 = vmatpush1.bf16.msra.mxu0 %v460
      %479 = vmatprep.subr.bf16.mxu0 0
      %480 = vmatpush1.bf16.msra.mxu0 %v462
      %481 = vmatprep.subr.bf16.mxu0 0
      %482 = vmatpush1.bf16.msra.mxu0 %v464
      %483 = vmatprep.subr.bf16.mxu0 0
      %484 = vmatpush1.bf16.msra.mxu0 0
      %485 = vmatprep.subr.bf16.mxu0 0
      %486 = vmatpush1.bf16.msra.mxu0 0
      %487 = vmatprep.subr.bf16.mxu0 0
      %488 = vmatpush1.bf16.msra.mxu0 0
      %489 = vmatprep.subr.bf16.mxu0 0
      %490 = vmatpush1.bf16.msra.mxu0 0
      %491 = vmatprep.subr.bf16.mxu0 0
      %492 = vmatpush1.bf16.msra.mxu0 0
      %493 = vmatprep.subr.bf16.mxu0 0
      %494 = vmatpush1.bf16.msra.mxu0 0
      %495 = vmatprep.subr.bf16.mxu0 0
      %496 = vmatpush1.bf16.msra.mxu0 0
      %497 = vmatprep.subr.bf16.mxu0 0
      %498 = vmatpush1.bf16.msra.mxu0 0
      %499 = vmatprep.subr.bf16.mxu0 0
      %500 = vmatpush1.bf16.msra.mxu0 0
      %501 = vmatprep.subr.bf16.mxu0 0
      %502 = vmatpush1.bf16.msra.mxu0 0
      %503 = vmatprep.subr.bf16.mxu0 0
      %504 = vmatpush1.bf16.msra.mxu0 0
      %505 = vmatprep.subr.bf16.mxu0 0
      %506 = vmatpush1.bf16.msra.mxu0 0
      %507 = vmatprep.mubr.bf16.mxu0 0
      %508 = vmatmul.mubr.bf16.gmra.mrb[0].mxu0 %v470
      %v509 = vpop.f32.mrb[0].mxu0
      %v510 = vadd.f32 0.0, %v509
      %v511 = vpop.f32.mrb[0].mxu0
      %v512 = vpop.f32.mrb[0].mxu0
      %v513 = vadd.f32 0.0, %v512
      %v514 = vpop.f32.mrb[0].mxu0
      %515 = vmatprep.mubr.bf16.mxu0 0
      %516 = vmatmul.mubr.bf16.gmra.mrb[0].mxu0 %v473
      %v517 = vpop.f32.mrb[0].mxu0
      %v518 = vadd.f32 0.0, %v517
      %v519 = vpop.f32.mrb[0].mxu0
      %v520 = vpop.f32.mrb[0].mxu0
      %v521 = vadd.f32 0.0, %v520
      %v522 = vpop.f32.mrb[0].mxu0
      %523 = vdwg.mxu0
      %v524 = vadd.f32 %v438, %v510
      %v525 = vadd.f32 %v439, %v513
      %v526 = vadd.f32 %v440, %v518
      %v527 = vadd.f32 %v441, %v521
      %v528 = vld [vmem:[%s2] sm:$0xff]
      %v529 = vld [vmem:[%s2 + $0x8] sm:$0xff]
      %v530 = vld [vmem:[%s2 + $0x10] sm:$0xff]
      %v531 = vld [vmem:[%s2 + $0x18] sm:$0xff]
      %533 = vset.pattern.permute.xlu0 0
      %534 = vperm.xlu0 %533, %v528
      %v535 = vpop.permute.xlu0 %534
      %538 = vset.pattern.permute.xlu0 0
      %539 = vperm.xlu0 %538, %v529
      %v540 = vpop.permute.xlu0 %539
      %543 = vset.pattern.permute.xlu0 0
      %544 = vperm.xlu0 %543, %v530
      %v545 = vpop.permute.xlu0 %544
      %548 = vset.pattern.permute.xlu0 0
      %549 = vperm.xlu0 %548, %v531
      %v550 = vpop.permute.xlu0 %549
      %v552 = vadd.f32 %v524, %v535
      %v553 = vadd.f32 %v525, %v540
      %v554 = vadd.f32 %v526, %v545
      %v555 = vadd.f32 %v527, %v550
      %vm556 = vcmp.ge.f32.partialorder %v552, 0.0
      %vm557 = vcmp.ge.f32.partialorder %v553, 0.0
      %vm558 = vcmp.ge.f32.partialorder %v554, 0.0
      %vm559 = vcmp.ge.f32.partialorder %v555, 0.0
      %v560 = vmul.f32 %v552, 0.2
      %v561 = vmul.f32 %v553, 0.2
      %v562 = vmul.f32 %v554, 0.2
      %v563 = vmul.f32 %v555, 0.2
      %v564 = vsel %vm556, %v552, %v560
      %v565 = vsel %vm557, %v553, %v561
      %v566 = vsel %vm558, %v554, %v562
      %v567 = vsel %vm559, %v555, %v563
      %v568 = vpack.c.bf16 %v565, %v564
      %v569 = vpack.c.bf16 %v567, %v566
      %v572 = vunpack.c.l.b16 %v568
      %v573 = vunpack.c.h.b16 %v568
      %v574 = vunpack.c.l.b16 %v569
      %v575 = vunpack.c.h.b16 %v569
      %v576 = vpack.c.b16 %v572, %v572
      %v577 = vpack.c.b16 %v573, %v573
      %v578 = vpack.c.b16 %v574, %v574
      %v579 = vpack.c.b16 %v575, %v575
      %vm584 = vcmask 158720
      %585 = vst.msk [vmem:[%s170] sm:$0xf] %vm584, %v576
      %586 = vst.msk [vmem:[%s170 + $0x4] sm:$0xf] %vm584, %v577
      %587 = vst.msk [vmem:[%s170 + $0x8] sm:$0xf] %vm584, %v578
      %588 = vst.msk [vmem:[%s170 + $0xc] sm:$0xf] %vm584, %v579
      %p589 = scmp.lt.s32.totalorder %s14, 1
      %s590 = scalar_select %p589, %s14, 1
      %s591 = smul.addr %s590, 4
      %s592 = smul.addr %s591, 4
      %s593 = scalar_lea.vmem %s3, %s592
      // Predicated region
      $region33: #{lapirn_forward.6} parent=31 // pred_check
        %p594 = pneg %p100
      $region34: #{lapirn_forward.6} parent=31 // pred_check_branch
        %596 = sbr.rel (%p594) target = $region36
      $region35: #{lapirn_forward.6} parent=31 // pred_region
        _
      $region36: #{lapirn_forward.6} parent=31 // pred_fallthru
        _
    $region32: #{lapirn_forward.6} parent=5 // pred_fallthru
      _
    %p597 = scmp.le.s32.totalorder 2, %s9
    // Predicated region
    $region37: #{lapirn_forward.6} parent=5 // pred_check
      %p598 = pneg %p597
    $region38: #{lapirn_forward.6} parent=5 // pred_check_branch
      %600 = sbr.rel (%p598) target = $region40
    $region39: #{lapirn_forward.6} parent=5 // pred_region
      %s601 = ssub.s32 %s9, 2
      // Predicated region
      $region41: #{lapirn_forward.6} parent=39 // pred_check
        %p602 = pneg %p106
      $region42: #{lapirn_forward.6} parent=39 // pred_check_branch
        %604 = sbr.rel (%p602) target = $region44
      $region43: #{lapirn_forward.6} parent=39 // pred_region
        %p605 = scmp.lt.s32.totalorder %s15, 1
        %s606 = scalar_select %p605, %s15, 1
        %s607 = smul.addr %s606, 4
        %s608 = smul.addr %s607, 4
        %s609 = scalar_lea.vmem %s3, %s608
      $region44: #{lapirn_forward.6} parent=39 // pred_fallthru
        _
    $region40: #{lapirn_forward.6} parent=5 // pred_fallthru
      _
  $region6: #{lapirn_forward.6} parent=0 // loop_footer
    %s13 = sadd.s32 1, %s9
  $region7: #{lapirn_forward.6} parent=0 // loop_footer_branch
    %8 = sbr.rel target = $region3
  $region8: #{lapirn_forward.6} parent=0 // loop_exit
    _

// kernel: lapirn_forward.8
$region0: #{lapirn_forward.8}
  #allocation0 [shape = 'u32[]', space=smem, size = 0x4, offset = 0x4, fixed_abs, tag = 'smem constant byte address 0x4 - core index']
  #allocation1 [shape = 'u32[144,128]{1,0:T(1,128)}', space=vmem, size = 0x12000, scoped, tag = 'internal scratch']
  %s0 = inlined_call_operand.vmem [shape: bf16[16,4], index: 0, kind: input, shape index: {}]
  %s1 = inlined_call_operand.vmem [shape: bf16[4,16], index: 1, kind: input, shape index: {}]
  %s2 = inlined_call_operand.vmem [shape: bf16[16,16], index: 2, kind: output, shape index: {}]
  %s3 = sld [smem:[#allocation0]]
  $region41: #{lapirn_forward.8} parent=0
    _
  %s5 = ssub.s32 1, %s3
  %s6 = scalar_select 0, %s5, %s3
  loop: start=0, step=1, limit=4
  $region2: #{lapirn_forward.8} parent=0 // loop_pre_header
    _
  $region3: #{lapirn_forward.8} parent=0 // loop_header
    %s8 = sphi 0, %s12
    %p9 = scmp.ge.s32.totalorder %s8, 4
    %s18 = sphi 0, %s20
    %s21 = sphi 0, %s18
    %s22 = sphi 0, %s21
    %s38 = sphi 0, %s22
    %s42 = sphi 0, %s42
    %s44 = sphi 0, %s42
    %s45 = sphi 0, %s44
    %s59 = sphi 0, %s45
    %s65 = sphi 0, %s67
    %s68 = sphi 0, %s65
    %s69 = sphi 0, %s68
    %s85 = sphi 0, %s69
  $region4: #{lapirn_forward.8} parent=0 // loop_header_branch
    %11 = sbr.rel (%p9) target = $region8
  $region5: #{lapirn_forward.8} parent=0 // loop_body
    %s13 = ssub.s32 %s8, 1
    %s14 = ssub.s32 %s8, 2
    %s15 = sadd.s32 %s8, 1
    %s16 = ssub.s32 %s8, %s15
    %p17 = scmp.eq.s32.totalorder %s16, 0
    %s19 = sadd.s32 %s18, 1
    %s20 = scalar_select %p17, %s18, %s19
    %p23 = pneg %p17
    %p24 = scmp.eq.s32.totalorder %s8, 1
    %p25 = por %p23, %p24
    %p26 = scmp.ne.s32.totalorder %s18, %s21
    %p27 = scmp.eq.s32.totalorder %s8, 0
    %p28 = por %p26, %p27
    %p29 = scmp.ne.s32.totalorder %s18, %s21
    %p30 = scmp.eq.s32.totalorder %s13, 1
    %p31 = por %p29, %p30
    %p32 = scmp.ne.s32.totalorder %s21, %s22
    %p33 = scmp.eq.s32.totalorder %s13, 0
    %p34 = por %p32, %p33
    %p35 = scmp.ne.s32.totalorder %s21, %s22
    %p36 = scmp.eq.s32.totalorder %s14, 1
    %p37 = por %p35, %p36
    %p39 = scmp.ne.s32.totalorder %s22, %s38
    %p40 = scmp.eq.s32.totalorder %s14, 0
    %p41 = por %p39, %p40
    %s43 = sadd.s32 %s42, 1
    %p46 = scmp.eq.s32.totalorder %s8, 1
    %p47 = scmp.ne.s32.totalorder %s42, %s44
    %p48 = scmp.eq.s32.totalorder %s8, 0
    %p49 = por %p47, %p48
    %p50 = scmp.ne.s32.totalorder %s42, %s44
    %p51 = scmp.eq.s32.totalorder %s13, 1
    %p52 = por %p50, %p51
    %p53 = scmp.ne.s32.totalorder %s44, %s45
    %p54 = scmp.eq.s32.totalorder %s13, 0
    %p55 = por %p53, %p54
    %p56 = scmp.ne.s32.totalorder %s44, %s45
    %p57 = scmp.eq.s32.totalorder %s14, 1
    %p58 = por %p56, %p57
    %p60 = scmp.ne.s32.totalorder %s45, %s59
    %p61 = scmp.eq.s32.totalorder %s14, 0
    %p62 = por %p60, %p61
    %s63 = ssub.s32 %s8, %s15
    %p64 = scmp.eq.s32.totalorder %s63, 0
    %s66 = sadd.s32 %s65, 1
    %s67 = scalar_select %p64, %s65, %s66
    %p70 = pneg %p64
    %p71 = scmp.eq.s32.totalorder %s8, 1
    %p72 = por %p70, %p71
    %p73 = scmp.ne.s32.totalorder %s65, %s68
    %p74 = scmp.eq.s32.totalorder %s8, 0
    %p75 = por %p73, %p74
    %p76 = scmp.ne.s32.totalorder %s65, %s68
    %p77 = scmp.eq.s32.totalorder %s13, 1
    %p78 = por %p76, %p77
    %p79 = scmp.ne.s32.totalorder %s68, %s69
    %p80 = scmp.eq.s32.totalorder %s13, 0
    %p81 = por %p79, %p80
    %p82 = scmp.ne.s32.totalorder %s68, %s69
    %p83 = scmp.eq.s32.totalorder %s14, 1
    %p84 = por %p82, %p83
    %p86 = scmp.ne.s32.totalorder %s69, %s85
    %p87 = scmp.eq.s32.totalorder %s14, 0
    %p88 = por %p86, %p87
    %p89 = scmp.le.s32.totalorder 1, %s8
    %p90 = scmp.lt.s32.totalorder %s8, 3
    %p91 = pnand %p89, %p90
    %p92 = pneg %p91
    // Predicated region
    $region9: #{lapirn_forward.8} parent=5 // pred_check
      _
    $region10: #{lapirn_forward.8} parent=5 // pred_check_branch
      %94 = sbr.rel (%p91) target = $region12
    $region11: #{lapirn_forward.8} parent=5 // pred_region
      %s95 = ssub.s32 %s8, 1
      // Predicated region
      $region13: #{lapirn_forward.8} parent=11 // pred_check
        %p96 = pneg %p55
      $region14: #{lapirn_forward.8} parent=11 // pred_check_branch
        %98 = sbr.rel (%p96) target = $region16
      $region15: #{lapirn_forward.8} parent=11 // pred_region
        _
      $region16: #{lapirn_forward.8} parent=11 // pred_fallthru
        _
    $region12: #{lapirn_forward.8} parent=5 // pred_fallthru
      _
    %p99 = scmp.lt.s32.totalorder %s8, 2
    // Predicated region
    $region17: #{lapirn_forward.8} parent=5 // pred_check
      %p100 = pneg %p99
    $region18: #{lapirn_forward.8} parent=5 // pred_check_branch
      %102 = sbr.rel (%p100) target = $region20
    $region19: #{lapirn_forward.8} parent=5 // pred_region
      // Predicated region
      $region21: #{lapirn_forward.8} parent=19 // pred_check
        %p103 = pneg %p28
      $region22: #{lapirn_forward.8} parent=19 // pred_check_branch
        %105 = sbr.rel (%p103) target = $region24
      $region23: #{lapirn_forward.8} parent=19 // pred_region
        %p106 = scmp.lt.s32.totalorder %s8, 1
        %s107 = scalar_select %p106, %s8, 1
        %s108 = smul.addr %s107, 4
        %s109 = scalar_lea.vmem %s0, %s108
      $region24: #{lapirn_forward.8} parent=19 // pred_fallthru
        _
    $region20: #{lapirn_forward.8} parent=5 // pred_fallthru
      _
    %p110 = scmp.le.s32.totalorder 1, %s8
    %p111 = scmp.lt.s32.totalorder %s8, 3
    %p112 = pnand %p110, %p111
    %p113 = pneg %p112
    // Predicated region
    $region25: #{lapirn_forward.8} parent=5 // pred_check
      _
    $region26: #{lapirn_forward.8} parent=5 // pred_check_branch
      %115 = sbr.rel (%p112) target = $region28
    $region27: #{lapirn_forward.8} parent=5 // pred_region
      %s116 = ssub.s32 %s8, 1
      %p117 = scmp.lt.s32.totalorder %s13, 1
      %s118 = scalar_select %p117, %s13, 1
      %s119 = smul.addr %s118, 4
      %s120 = scalar_lea.vmem %s0, %s119
      %p121 = pneg %p34
      %p122 = pneg %p31
      %p123 = pneg %p55
      %p124 = pneg %p52
      %p125 = pneg %p81
      %p126 = pneg %p78
      %p127 = scmp.lt.s32.totalorder %s13, 1
      %s128 = scalar_select %p127, %s13, 1
      %s129 = smul.addr %s128, 4
      %s130 = scalar_lea.vmem %s2, %s129
      %p131 = scmp.lt.s32.totalorder %s13, 1
      %s132 = scalar_select %p131, %s13, 1
      %s133 = smul.addr %s132, 4
      %s134 = scalar_lea.vmem %s0, %s133
      %p135 = scmp.lt.s32.totalorder %s13, 1
      %s136 = scalar_select %p135, %s13, 1
      %s137 = smul.addr %s136, 4
      %s138 = scalar_lea.vmem %s2, %s137
      %v140 = vld [vmem:[%s134] sm:$0xf]
      %v141 = vld [vmem:[%s1] sm:$0x3]
      %vm142 = vcmask 31744
      %v144 = vsel %vm142, %v140, 0
      %vm146 = vcmask 1041408
      %v148 = vsel %vm146, %v141, 0
      %150 = vmatprep.subr.bf16.mxu0 0
      %151 = vmatpush1.bf16.msra.mxu0 %v148
      %152 = vmatprep.subr.bf16.mxu0 0
      %153 = vmatpush1.bf16.msra.mxu0 0
      %154 = vmatprep.subr.bf16.mxu0 0
      %155 = vmatpush1.bf16.msra.mxu0 0
      %156 = vmatprep.subr.bf16.mxu0 0
      %157 = vmatpush1.bf16.msra.mxu0 0
      %158 = vmatprep.subr.bf16.mxu0 0
      %159 = vmatpush1.bf16.msra.mxu0 0
      %160 = vmatprep.subr.bf16.mxu0 0
      %161 = vmatpush1.bf16.msra.mxu0 0
      %162 = vmatprep.subr.bf16.mxu0 0
      %163 = vmatpush1.bf16.msra.mxu0 0
      %164 = vmatprep.subr.bf16.mxu0 0
      %165 = vmatpush1.bf16.msra.mxu0 0
      %166 = vmatprep.subr.bf16.mxu0 0
      %167 = vmatpush1.bf16.msra.mxu0 0
      %168 = vmatprep.subr.bf16.mxu0 0
      %169 = vmatpush1.bf16.msra.mxu0 0
      %170 = vmatprep.subr.bf16.mxu0 0
      %171 = vmatpush1.bf16.msra.mxu0 0
      %172 = vmatprep.subr.bf16.mxu0 0
      %173 = vmatpush1.bf16.msra.mxu0 0
      %174 = vmatprep.subr.bf16.mxu0 0
      %175 = vmatpush1.bf16.msra.mxu0 0
      %176 = vmatprep.subr.bf16.mxu0 0
      %177 = vmatpush1.bf16.msra.mxu0 0
      %178 = vmatprep.subr.bf16.mxu0 0
      %179 = vmatpush1.bf16.msra.mxu0 0
      %180 = vmatprep.subr.bf16.mxu0 0
      %181 = vmatpush1.bf16.msra.mxu0 0
      %182 = vmatprep.mubr.bf16.mxu0 0
      %183 = vmatmul.mubr.bf16.gmra.mrb[0].mxu0 %v144
      %v184 = vpop.f32.mrb[0].mxu0
      %v185 = vadd.f32 0.0, %v184
      %v186 = vpop.f32.mrb[0].mxu0
      %v187 = vpop.f32.mrb[0].mxu0
      %v188 = vpop.f32.mrb[0].mxu0
      %189 = vdwg.mxu0
      %v190 = vpack.c.bf16 %v185, %v185
      %vm191 = vcmask 125952
      %192 = vst.msk [vmem:[%s138] sm:$0xf] %vm191, %v190
      %p193 = scmp.lt.s32.totalorder %s13, 1
      %s194 = scalar_select %p193, %s13, 1
      %s195 = smul.addr %s194, 4
      %s196 = scalar_lea.vmem %s2, %s195
      // Predicated region
      $region29: #{lapirn_forward.8} parent=27 // pred_check
        %p197 = pneg %p78
      $region30: #{lapirn_forward.8} parent=27 // pred_check_branch
        %199 = sbr.rel (%p197) target = $region32
      $region31: #{lapirn_forward.8} parent=27 // pred_region
        _
      $region32: #{lapirn_forward.8} parent=27 // pred_fallthru
        _
    $region28: #{lapirn_forward.8} parent=5 // pred_fallthru
      _
    %p200 = scmp.le.s32.totalorder 2, %s8
    // Predicated region
    $region33: #{lapirn_forward.8} parent=5 // pred_check
      %p201 = pneg %p200
    $region34: #{lapirn_forward.8} parent=5 // pred_check_branch
      %203 = sbr.rel (%p201) target = $region36
    $region35: #{lapirn_forward.8} parent=5 // pred_region
      %s204 = ssub.s32 %s8, 2
      // Predicated region
      $region37: #{lapirn_forward.8} parent=35 // pred_check
        %p205 = pneg %p84
      $region38: #{lapirn_forward.8} parent=35 // pred_check_branch
        %207 = sbr.rel (%p205) target = $region40
      $region39: #{lapirn_forward.8} parent=35 // pred_region
        %p208 = scmp.lt.s32.totalorder %s14, 1
        %s209 = scalar_select %p208, %s14, 1
        %s210 = smul.addr %s209, 4
        %s211 = scalar_lea.vmem %s2, %s210
      $region40: #{lapirn_forward.8} parent=35 // pred_fallthru
        _
    $region36: #{lapirn_forward.8} parent=5 // pred_fallthru
      _
  $region6: #{lapirn_forward.8} parent=0 // loop_footer
    %s12 = sadd.s32 1, %s8
  $region7: #{lapirn_forward.8} parent=0 // loop_footer_branch
    %7 = sbr.rel target = $region3
  $region8: #{lapirn_forward.8} parent=0 // loop_exit
    _

// kernel: lapirn_forward.9
$region0: #{lapirn_forward.9}
  #allocation0 [shape = 'u32[]', space=smem, size = 0x4, offset = 0x4, fixed_abs, tag = 'smem constant byte address 0x4 - core index']
  #allocation1 [shape = 'u32[144,128]{1,0:T(1,128)}', space=vmem, size = 0x12000, scoped, tag = 'internal scratch']
  %s0 = inlined_call_operand.vmem [shape: bf16[64,4], index: 0, kind: input, shape index: {}]
  %s1 = inlined_call_operand.vmem [shape: bf16[4,16], index: 1, kind: input, shape index: {}]
  %s2 = inlined_call_operand.vmem [shape: f32[64,16], index: 2, kind: output, shape index: {}]
  %s3 = sld [smem:[#allocation0]]
  $region41: #{lapirn_forward.9} parent=0
    _
  %s5 = ssub.s32 1, %s3
  %s6 = scalar_select 0, %s5, %s3
  loop: start=0, step=1, limit=4
  $region2: #{lapirn_forward.9} parent=0 // loop_pre_header
    _
  $region3: #{lapirn_forward.9} parent=0 // loop_header
    %s8 = sphi 0, %s12
    %p9 = scmp.ge.s32.totalorder %s8, 4
    %s18 = sphi 0, %s20
    %s21 = sphi 0, %s18
    %s22 = sphi 0, %s21
    %s38 = sphi 0, %s22
    %s42 = sphi 0, %s42
    %s44 = sphi 0, %s42
    %s45 = sphi 0, %s44
    %s59 = sphi 0, %s45
    %s65 = sphi 0, %s67
    %s68 = sphi 0, %s65
    %s69 = sphi 0, %s68
    %s85 = sphi 0, %s69
  $region4: #{lapirn_forward.9} parent=0 // loop_header_branch
    %11 = sbr.rel (%p9) target = $region8
  $region5: #{lapirn_forward.9} parent=0 // loop_body
    %s13 = ssub.s32 %s8, 1
    %s14 = ssub.s32 %s8, 2
    %s15 = sadd.s32 %s8, 1
    %s16 = ssub.s32 %s8, %s15
    %p17 = scmp.eq.s32.totalorder %s16, 0
    %s19 = sadd.s32 %s18, 1
    %s20 = scalar_select %p17, %s18, %s19
    %p23 = pneg %p17
    %p24 = scmp.eq.s32.totalorder %s8, 1
    %p25 = por %p23, %p24
    %p26 = scmp.ne.s32.totalorder %s18, %s21
    %p27 = scmp.eq.s32.totalorder %s8, 0
    %p28 = por %p26, %p27
    %p29 = scmp.ne.s32.totalorder %s18, %s21
    %p30 = scmp.eq.s32.totalorder %s13, 1
    %p31 = por %p29, %p30
    %p32 = scmp.ne.s32.totalorder %s21, %s22
    %p33 = scmp.eq.s32.totalorder %s13, 0
    %p34 = por %p32, %p33
    %p35 = scmp.ne.s32.totalorder %s21, %s22
    %p36 = scmp.eq.s32.totalorder %s14, 1
    %p37 = por %p35, %p36
    %p39 = scmp.ne.s32.totalorder %s22, %s38
    %p40 = scmp.eq.s32.totalorder %s14, 0
    %p41 = por %p39, %p40
    %s43 = sadd.s32 %s42, 1
    %p46 = scmp.eq.s32.totalorder %s8, 1
    %p47 = scmp.ne.s32.totalorder %s42, %s44
    %p48 = scmp.eq.s32.totalorder %s8, 0
    %p49 = por %p47, %p48
    %p50 = scmp.ne.s32.totalorder %s42, %s44
    %p51 = scmp.eq.s32.totalorder %s13, 1
    %p52 = por %p50, %p51
    %p53 = scmp.ne.s32.totalorder %s44, %s45
    %p54 = scmp.eq.s32.totalorder %s13, 0
    %p55 = por %p53, %p54
    %p56 = scmp.ne.s32.totalorder %s44, %s45
    %p57 = scmp.eq.s32.totalorder %s14, 1
    %p58 = por %p56, %p57
    %p60 = scmp.ne.s32.totalorder %s45, %s59
    %p61 = scmp.eq.s32.totalorder %s14, 0
    %p62 = por %p60, %p61
    %s63 = ssub.s32 %s8, %s15
    %p64 = scmp.eq.s32.totalorder %s63, 0
    %s66 = sadd.s32 %s65, 1
    %s67 = scalar_select %p64, %s65, %s66
    %p70 = pneg %p64
    %p71 = scmp.eq.s32.totalorder %s8, 1
    %p72 = por %p70, %p71
    %p73 = scmp.ne.s32.totalorder %s65, %s68
    %p74 = scmp.eq.s32.totalorder %s8, 0
    %p75 = por %p73, %p74
    %p76 = scmp.ne.s32.totalorder %s65, %s68
    %p77 = scmp.eq.s32.totalorder %s13, 1
    %p78 = por %p76, %p77
    %p79 = scmp.ne.s32.totalorder %s68, %s69
    %p80 = scmp.eq.s32.totalorder %s13, 0
    %p81 = por %p79, %p80
    %p82 = scmp.ne.s32.totalorder %s68, %s69
    %p83 = scmp.eq.s32.totalorder %s14, 1
    %p84 = por %p82, %p83
    %p86 = scmp.ne.s32.totalorder %s69, %s85
    %p87 = scmp.eq.s32.totalorder %s14, 0
    %p88 = por %p86, %p87
    %p89 = scmp.le.s32.totalorder 1, %s8
    %p90 = scmp.lt.s32.totalorder %s8, 3
    %p91 = pnand %p89, %p90
    %p92 = pneg %p91
    // Predicated region
    $region9: #{lapirn_forward.9} parent=5 // pred_check
      _
    $region10: #{lapirn_forward.9} parent=5 // pred_check_branch
      %94 = sbr.rel (%p91) target = $region12
    $region11: #{lapirn_forward.9} parent=5 // pred_region
      %s95 = ssub.s32 %s8, 1
      // Predicated region
      $region13: #{lapirn_forward.9} parent=11 // pred_check
        %p96 = pneg %p55
      $region14: #{lapirn_forward.9} parent=11 // pred_check_branch
        %98 = sbr.rel (%p96) target = $region16
      $region15: #{lapirn_forward.9} parent=11 // pred_region
        _
      $region16: #{lapirn_forward.9} parent=11 // pred_fallthru
        _
    $region12: #{lapirn_forward.9} parent=5 // pred_fallthru
      _
    %p99 = scmp.lt.s32.totalorder %s8, 2
    // Predicated region
    $region17: #{lapirn_forward.9} parent=5 // pred_check
      %p100 = pneg %p99
    $region18: #{lapirn_forward.9} parent=5 // pred_check_branch
      %102 = sbr.rel (%p100) target = $region20
    $region19: #{lapirn_forward.9} parent=5 // pred_region
      // Predicated region
      $region21: #{lapirn_forward.9} parent=19 // pred_check
        %p103 = pneg %p28
      $region22: #{lapirn_forward.9} parent=19 // pred_check_branch
        %105 = sbr.rel (%p103) target = $region24
      $region23: #{lapirn_forward.9} parent=19 // pred_region
        %s106 = smul.u32 4, %s8
        %p107 = scmp.lt.s32.totalorder %s106, 7
        %s108 = scalar_select %p107, %s106, 7
        %s109 = smul.addr %s108, 4
        %s110 = scalar_lea.vmem %s0, %s109
        %s111 = smul.u32 4, %s8
      $region24: #{lapirn_forward.9} parent=19 // pred_fallthru
        _
    $region20: #{lapirn_forward.9} parent=5 // pred_fallthru
      _
    %p112 = scmp.le.s32.totalorder 1, %s8
    %p113 = scmp.lt.s32.totalorder %s8, 3
    %p114 = pnand %p112, %p113
    %p115 = pneg %p114
    // Predicated region
    $region25: #{lapirn_forward.9} parent=5 // pred_check
      _
    $region26: #{lapirn_forward.9} parent=5 // pred_check_branch
      %117 = sbr.rel (%p114) target = $region28
    $region27: #{lapirn_forward.9} parent=5 // pred_region
      %s118 = ssub.s32 %s8, 1
      %s119 = smul.u32 4, %s13
      %p120 = scmp.lt.s32.totalorder %s119, 7
      %s121 = scalar_select %p120, %s119, 7
      %s122 = smul.addr %s121, 4
      %s123 = scalar_lea.vmem %s0, %s122
      %p124 = pneg %p34
      %p125 = pneg %p31
      %p126 = pneg %p55
      %p127 = pneg %p52
      %p128 = pneg %p81
      %p129 = pneg %p78
      %s130 = smul.u32 4, %s13
      %p131 = scmp.lt.s32.totalorder %s130, 7
      %s132 = scalar_select %p131, %s130, 7
      %s133 = smul.addr %s132, 8
      %s134 = scalar_lea.vmem %s2, %s133
      %s135 = smul.u32 4, %s13
      %p136 = scmp.lt.s32.totalorder %s135, 7
      %s137 = scalar_select %p136, %s135, 7
      %s138 = smul.addr %s137, 4
      %s139 = scalar_lea.vmem %s0, %s138
      %s140 = smul.u32 4, %s13
      %s141 = smul.u32 4, %s13
      %p142 = scmp.lt.s32.totalorder %s141, 7
      %s143 = scalar_select %p142, %s141, 7
      %s144 = smul.addr %s143, 8
      %s145 = scalar_lea.vmem %s2, %s144
      %s146 = smul.u32 4, %s13
      %v148 = vld [vmem:[%s139] sm:$0xf]
      %v149 = vld [vmem:[%s139 + $0x4] sm:$0xf]
      %v150 = vld [vmem:[%s139 + $0x8] sm:$0xf]
      %v151 = vld [vmem:[%s139 + $0xc] sm:$0xf]
      %v152 = vld [vmem:[%s1] sm:$0x3]
      %v157 = vunpack.c.l.b16 %v148
      %v158 = vunpack.c.l.b16 %v149
      %v159 = vunpack.c.l.b16 %v150
      %v160 = vunpack.c.l.b16 %v151
      %v161 = vpack.c.b16 %v158, %v157
      %v162 = vpack.c.b16 %v160, %v159
      %vm163 = vcmask 31744
      %v165 = vsel %vm163, %v161, 0
      %v168 = vsel %vm163, %v162, 0
      %vm170 = vcmask 1041408
      %v172 = vsel %vm170, %v152, 0
      %174 = vmatprep.subr.bf16.mxu0 0
      %175 = vmatpush1.bf16.msra.mxu0 %v172
      %176 = vmatprep.subr.bf16.mxu0 0
      %177 = vmatpush1.bf16.msra.mxu0 0
      %178 = vmatprep.subr.bf16.mxu0 0
      %179 = vmatpush1.bf16.msra.mxu0 0
      %180 = vmatprep.subr.bf16.mxu0 0
      %181 = vmatpush1.bf16.msra.mxu0 0
      %182 = vmatprep.subr.bf16.mxu0 0
      %183 = vmatpush1.bf16.msra.mxu0 0
      %184 = vmatprep.subr.bf16.mxu0 0
      %185 = vmatpush1.bf16.msra.mxu0 0
      %186 = vmatprep.subr.bf16.mxu0 0
      %187 = vmatpush1.bf16.msra.mxu0 0
      %188 = vmatprep.subr.bf16.mxu0 0
      %189 = vmatpush1.bf16.msra.mxu0 0
      %190 = vmatprep.subr.bf16.mxu0 0
      %191 = vmatpush1.bf16.msra.mxu0 0
      %192 = vmatprep.subr.bf16.mxu0 0
      %193 = vmatpush1.bf16.msra.mxu0 0
      %194 = vmatprep.subr.bf16.mxu0 0
      %195 = vmatpush1.bf16.msra.mxu0 0
      %196 = vmatprep.subr.bf16.mxu0 0
      %197 = vmatpush1.bf16.msra.mxu0 0
      %198 = vmatprep.subr.bf16.mxu0 0
      %199 = vmatpush1.bf16.msra.mxu0 0
      %200 = vmatprep.subr.bf16.mxu0 0
      %201 = vmatpush1.bf16.msra.mxu0 0
      %202 = vmatprep.subr.bf16.mxu0 0
      %203 = vmatpush1.bf16.msra.mxu0 0
      %204 = vmatprep.subr.bf16.mxu0 0
      %205 = vmatpush1.bf16.msra.mxu0 0
      %206 = vmatprep.mubr.bf16.mxu0 0
      %207 = vmatmul.mubr.bf16.gmra.mrb[0].mxu0 %v165
      %v208 = vpop.f32.mrb[0].mxu0
      %v209 = vadd.f32 0.0, %v208
      %v210 = vpop.f32.mrb[0].mxu0
      %v211 = vpop.f32.mrb[0].mxu0
      %v212 = vadd.f32 0.0, %v211
      %v213 = vpop.f32.mrb[0].mxu0
      %214 = vmatprep.mubr.bf16.mxu0 0
      %215 = vmatmul.mubr.bf16.gmra.mrb[0].mxu0 %v168
      %v216 = vpop.f32.mrb[0].mxu0
      %v217 = vadd.f32 0.0, %v216
      %v218 = vpop.f32.mrb[0].mxu0
      %v219 = vpop.f32.mrb[0].mxu0
      %v220 = vadd.f32 0.0, %v219
      %v221 = vpop.f32.mrb[0].mxu0
      %222 = vdwg.mxu0
      %vm223 = vcmask 130048
      %224 = vst.msk [vmem:[%s145] sm:$0xff] %vm223, %v209
      %225 = vst.msk [vmem:[%s145 + $0x8] sm:$0xff] %vm223, %v212
      %226 = vst.msk [vmem:[%s145 + $0x10] sm:$0xff] %vm223, %v217
      %227 = vst.msk [vmem:[%s145 + $0x18] sm:$0xff] %vm223, %v220
      %s228 = smul.u32 4, %s13
      %p229 = scmp.lt.s32.totalorder %s228, 7
      %s230 = scalar_select %p229, %s228, 7
      %s231 = smul.addr %s230, 8
      %s232 = scalar_lea.vmem %s2, %s231
      // Predicated region
      $region29: #{lapirn_forward.9} parent=27 // pred_check
        %p233 = pneg %p78
      $region30: #{lapirn_forward.9} parent=27 // pred_check_branch
        %235 = sbr.rel (%p233) target = $region32
      $region31: #{lapirn_forward.9} parent=27 // pred_region
        %s236 = smul.u32 4, %s13
      $region32: #{lapirn_forward.9} parent=27 // pred_fallthru
        _
    $region28: #{lapirn_forward.9} parent=5 // pred_fallthru
      _
    %p237 = scmp.le.s32.totalorder 2, %s8
    // Predicated region
    $region33: #{lapirn_forward.9} parent=5 // pred_check
      %p238 = pneg %p237
    $region34: #{lapirn_forward.9} parent=5 // pred_check_branch
      %240 = sbr.rel (%p238) target = $region36
    $region35: #{lapirn_forward.9} parent=5 // pred_region
      %s241 = ssub.s32 %s8, 2
      // Predicated region
      $region37: #{lapirn_forward.9} parent=35 // pred_check
        %p242 = pneg %p84
      $region38: #{lapirn_forward.9} parent=35 // pred_check_branch
        %244 = sbr.rel (%p242) target = $region40
      $region39: #{lapirn_forward.9} parent=35 // pred_region
        %s245 = smul.u32 4, %s14
        %p246 = scmp.lt.s32.totalorder %s245, 7
        %s247 = scalar_select %p246, %s245, 7
        %s248 = smul.addr %s247, 8
        %s249 = scalar_lea.vmem %s2, %s248
      $region40: #{lapirn_forward.9} parent=35 // pred_fallthru
        _
    $region36: #{lapirn_forward.9} parent=5 // pred_fallthru
      _
  $region6: #{lapirn_forward.9} parent=0 // loop_footer
    %s12 = sadd.s32 1, %s8
  $region7: #{lapirn_forward.9} parent=0 // loop_footer_branch
    %7 = sbr.rel target = $region3
  $region8: #{lapirn_forward.9} parent=0 // loop_exit
    _

// kernel: lapirn_forward.7
$region0: #{lapirn_forward.7}
  #allocation0 [shape = 'u32[]', space=smem, size = 0x4, offset = 0x4, fixed_abs, tag = 'smem constant byte address 0x4 - core index']
  #allocation1 [shape = 'u32[144,128]{1,0:T(1,128)}', space=vmem, size = 0x12000, scoped, tag = 'internal scratch']
  %s0 = inlined_call_operand.vmem [shape: bf16[9,2,32], index: 0, kind: input, shape index: {}]
  %s1 = inlined_call_operand.vmem [shape: bf16[2,32,38], index: 1, kind: input, shape index: {}]
  %s2 = inlined_call_operand.vmem [shape: f32[2,1], index: 2, kind: input, shape index: {}]
  %s3 = inlined_call_operand.vmem [shape: bf16[2,2,24], index: 3, kind: output, shape index: {}]
  %s4 = sld [smem:[#allocation0]]
  $region45: #{lapirn_forward.7} parent=0
    _
  %s6 = ssub.s32 1, %s4
  %s7 = scalar_select 0, %s6, %s4
  loop: start=0, step=1, limit=4
  $region2: #{lapirn_forward.7} parent=0 // loop_pre_header
    _
  $region3: #{lapirn_forward.7} parent=0 // loop_header
    %s9 = sphi 0, %s13
    %p10 = scmp.ge.s32.totalorder %s9, 4
    %s17 = sphi 0, %s17
    %s19 = sphi 0, %s17
    %s20 = sphi 0, %s19
    %s34 = sphi 0, %s20
    %s40 = sphi 0, %s42
    %s43 = sphi 0, %s40
    %s44 = sphi 0, %s43
    %s60 = sphi 0, %s44
    %s64 = sphi 0, %s64
    %s66 = sphi 0, %s64
    %s67 = sphi 0, %s66
    %s81 = sphi 0, %s67
    %s87 = sphi 0, %s89
    %s90 = sphi 0, %s87
    %s91 = sphi 0, %s90
    %s107 = sphi 0, %s91
  $region4: #{lapirn_forward.7} parent=0 // loop_header_branch
    %12 = sbr.rel (%p10) target = $region8
  $region5: #{lapirn_forward.7} parent=0 // loop_body
    %s14 = ssub.s32 %s9, 1
    %s15 = ssub.s32 %s9, 2
    %s16 = sadd.s32 %s9, 1
    %s18 = sadd.s32 %s17, 1
    %p21 = scmp.eq.s32.totalorder %s9, 1
    %p22 = scmp.ne.s32.totalorder %s17, %s19
    %p23 = scmp.eq.s32.totalorder %s9, 0
    %p24 = por %p22, %p23
    %p25 = scmp.ne.s32.totalorder %s17, %s19
    %p26 = scmp.eq.s32.totalorder %s14, 1
    %p27 = por %p25, %p26
    %p28 = scmp.ne.s32.totalorder %s19, %s20
    %p29 = scmp.eq.s32.totalorder %s14, 0
    %p30 = por %p28, %p29
    %p31 = scmp.ne.s32.totalorder %s19, %s20
    %p32 = scmp.eq.s32.totalorder %s15, 1
    %p33 = por %p31, %p32
    %p35 = scmp.ne.s32.totalorder %s20, %s34
    %p36 = scmp.eq.s32.totalorder %s15, 0
    %p37 = por %p35, %p36
    %s38 = ssub.s32 %s9, %s16
    %p39 = scmp.eq.s32.totalorder %s38, 0
    %s41 = sadd.s32 %s40, 1
    %s42 = scalar_select %p39, %s40, %s41
    %p45 = pneg %p39
    %p46 = scmp.eq.s32.totalorder %s9, 1
    %p47 = por %p45, %p46
    %p48 = scmp.ne.s32.totalorder %s40, %s43
    %p49 = scmp.eq.s32.totalorder %s9, 0
    %p50 = por %p48, %p49
    %p51 = scmp.ne.s32.totalorder %s40, %s43
    %p52 = scmp.eq.s32.totalorder %s14, 1
    %p53 = por %p51, %p52
    %p54 = scmp.ne.s32.totalorder %s43, %s44
    %p55 = scmp.eq.s32.totalorder %s14, 0
    %p56 = por %p54, %p55
    %p57 = scmp.ne.s32.totalorder %s43, %s44
    %p58 = scmp.eq.s32.totalorder %s15, 1
    %p59 = por %p57, %p58
    %p61 = scmp.ne.s32.totalorder %s44, %s60
    %p62 = scmp.eq.s32.totalorder %s15, 0
    %p63 = por %p61, %p62
    %s65 = sadd.s32 %s64, 1
    %p68 = scmp.eq.s32.totalorder %s9, 1
    %p69 = scmp.ne.s32.totalorder %s64, %s66
    %p70 = scmp.eq.s32.totalorder %s9, 0
    %p71 = por %p69, %p70
    %p72 = scmp.ne.s32.totalorder %s64, %s66
    %p73 = scmp.eq.s32.totalorder %s14, 1
    %p74 = por %p72, %p73
    %p75 = scmp.ne.s32.totalorder %s66, %s67
    %p76 = scmp.eq.s32.totalorder %s14, 0
    %p77 = por %p75, %p76
    %p78 = scmp.ne.s32.totalorder %s66, %s67
    %p79 = scmp.eq.s32.totalorder %s15, 1
    %p80 = por %p78, %p79
    %p82 = scmp.ne.s32.totalorder %s67, %s81
    %p83 = scmp.eq.s32.totalorder %s15, 0
    %p84 = por %p82, %p83
    %s85 = ssub.s32 %s9, %s16
    %p86 = scmp.eq.s32.totalorder %s85, 0
    %s88 = sadd.s32 %s87, 1
    %s89 = scalar_select %p86, %s87, %s88
    %p92 = pneg %p86
    %p93 = scmp.eq.s32.totalorder %s9, 1
    %p94 = por %p92, %p93
    %p95 = scmp.ne.s32.totalorder %s87, %s90
    %p96 = scmp.eq.s32.totalorder %s9, 0
    %p97 = por %p95, %p96
    %p98 = scmp.ne.s32.totalorder %s87, %s90
    %p99 = scmp.eq.s32.totalorder %s14, 1
    %p100 = por %p98, %p99
    %p101 = scmp.ne.s32.totalorder %s90, %s91
    %p102 = scmp.eq.s32.totalorder %s14, 0
    %p103 = por %p101, %p102
    %p104 = scmp.ne.s32.totalorder %s90, %s91
    %p105 = scmp.eq.s32.totalorder %s15, 1
    %p106 = por %p104, %p105
    %p108 = scmp.ne.s32.totalorder %s91, %s107
    %p109 = scmp.eq.s32.totalorder %s15, 0
    %p110 = por %p108, %p109
    %p111 = scmp.le.s32.totalorder 1, %s9
    %p112 = scmp.lt.s32.totalorder %s9, 3
    %p113 = pnand %p111, %p112
    %p114 = pneg %p113
    // Predicated region
    $region9: #{lapirn_forward.7} parent=5 // pred_check
      _
    $region10: #{lapirn_forward.7} parent=5 // pred_check_branch
      %116 = sbr.rel (%p113) target = $region12
    $region11: #{lapirn_forward.7} parent=5 // pred_region
      %s117 = ssub.s32 %s9, 1
      // Predicated region
      $region13: #{lapirn_forward.7} parent=11 // pred_check
        %p118 = pneg %p30
      $region14: #{lapirn_forward.7} parent=11 // pred_check_branch
        %120 = sbr.rel (%p118) target = $region16
      $region15: #{lapirn_forward.7} parent=11 // pred_region
        _
      $region16: #{lapirn_forward.7} parent=11 // pred_fallthru
        _
      // Predicated region
      $region17: #{lapirn_forward.7} parent=11 // pred_check
        %p121 = pneg %p77
      $region18: #{lapirn_forward.7} parent=11 // pred_check_branch
        %123 = sbr.rel (%p121) target = $region20
      $region19: #{lapirn_forward.7} parent=11 // pred_region
        _
      $region20: #{lapirn_forward.7} parent=11 // pred_fallthru
        _
    $region12: #{lapirn_forward.7} parent=5 // pred_fallthru
      _
    %p124 = scmp.lt.s32.totalorder %s9, 2
    // Predicated region
    $region21: #{lapirn_forward.7} parent=5 // pred_check
      %p125 = pneg %p124
    $region22: #{lapirn_forward.7} parent=5 // pred_check_branch
      %127 = sbr.rel (%p125) target = $region24
    $region23: #{lapirn_forward.7} parent=5 // pred_region
      // Predicated region
      $region25: #{lapirn_forward.7} parent=23 // pred_check
        %p128 = pneg %p50
      $region26: #{lapirn_forward.7} parent=23 // pred_check_branch
        %130 = sbr.rel (%p128) target = $region28
      $region27: #{lapirn_forward.7} parent=23 // pred_region
        %p131 = scmp.lt.s32.totalorder %s9, 1
        %s132 = scalar_select %p131, %s9, 1
        %s133 = smul.addr %s132, 4
        %s134 = smul.addr %s133, 4
        %s135 = scalar_lea.vmem %s1, %s134
      $region28: #{lapirn_forward.7} parent=23 // pred_fallthru
        _
    $region24: #{lapirn_forward.7} parent=5 // pred_fallthru
      _
    %p136 = scmp.le.s32.totalorder 1, %s9
    %p137 = scmp.lt.s32.totalorder %s9, 3
    %p138 = pnand %p136, %p137
    %p139 = pneg %p138
    // Predicated region
    $region29: #{lapirn_forward.7} parent=5 // pred_check
      _
    $region30: #{lapirn_forward.7} parent=5 // pred_check_branch
      %141 = sbr.rel (%p138) target = $region32
    $region31: #{lapirn_forward.7} parent=5 // pred_region
      %s142 = ssub.s32 %s9, 1
      %p143 = pneg %p30
      %p144 = pneg %p27
      %p145 = scmp.lt.s32.totalorder %s14, 1
      %s146 = scalar_select %p145, %s14, 1
      %s147 = smul.addr %s146, 4
      %s148 = smul.addr %s147, 4
      %s149 = scalar_lea.vmem %s1, %s148
      %p150 = pneg %p56
      %p151 = pneg %p53
      %p152 = pneg %p77
      %p153 = pneg %p74
      %p154 = pneg %p103
      %p155 = pneg %p100
      %p156 = scmp.lt.s32.totalorder %s14, 1
      %s157 = scalar_select %p156, %s14, 1
      %s158 = scalar_lea.vmem %s3, %s157
      %p159 = scmp.lt.s32.totalorder %s14, 1
      %s160 = scalar_select %p159, %s14, 1
      %s161 = smul.addr %s160, 4
      %s162 = smul.addr %s161, 4
      %s163 = scalar_lea.vmem %s1, %s162
      %p164 = scmp.lt.s32.totalorder %s14, 1
      %s165 = scalar_select %p164, %s14, 1
      %s166 = scalar_lea.vmem %s3, %s165
      %v168 = vld [vmem:[%s163] sm:$0xf]
      %v169 = vld [vmem:[%s163 + $0x4] sm:$0xf]
      %v170 = vld [vmem:[%s163 + $0x8] sm:$0xf]
      %v171 = vld [vmem:[%s163 + $0xc] sm:$0xf]
      %v172 = vld [vmem:[%s0] sm:$0x1]
      %s173 = scalar_lea.vmem %s0, 1
      %v174 = vld [vmem:[%s173] sm:$0x1]
      %v179 = vunpack.c.l.b16 %v168
      %v180 = vunpack.c.l.b16 %v169
      %v181 = vunpack.c.l.b16 %v170
      %v182 = vunpack.c.l.b16 %v171
      %v183 = vpack.c.b16 %v180, %v179
      %v184 = vpack.c.b16 %v182, %v181
      %185 = vrot.lane.b32.xlu0 %v183, 127
      %v186 = vpop.permute.xlu0 %185
      %187 = vrot.lane.b32.xlu0 %v184, 127
      %v188 = vpop.permute.xlu0 %187
      %vm191 = vcmask 261120
      %v193 = vsel %vm191, %v174, 0
      %195 = vmatprep.subr.bf16.mxu0 0
      %196 = vmatpush1.bf16.msra.mxu0 %v186
      %197 = vmatprep.subr.bf16.mxu0 0
      %198 = vmatpush1.bf16.msra.mxu0 %v188
      %199 = vmatprep.subr.bf16.mxu0 0
      %200 = vmatpush1.bf16.msra.mxu0 0
      %201 = vmatprep.subr.bf16.mxu0 0
      %202 = vmatpush1.bf16.msra.mxu0 0
      %203 = vmatprep.subr.bf16.mxu0 0
      %204 = vmatpush1.bf16.msra.mxu0 0
      %205 = vmatprep.subr.bf16.mxu0 0
      %206 = vmatpush1.bf16.msra.mxu0 0
      %207 = vmatprep.subr.bf16.mxu0 0
      %208 = vmatpush1.bf16.msra.mxu0 0
      %209 = vmatprep.subr.bf16.mxu0 0
      %210 = vmatpush1.bf16.msra.mxu0 0
      %211 = vmatprep.subr.bf16.mxu0 0
      %212 = vmatpush1.bf16.msra.mxu0 0
      %213 = vmatprep.subr.bf16.mxu0 0
      %214 = vmatpush1.bf16.msra.mxu0 0
      %215 = vmatprep.subr.bf16.mxu0 0
      %216 = vmatpush1.bf16.msra.mxu0 0
      %217 = vmatprep.subr.bf16.mxu0 0
      %218 = vmatpush1.bf16.msra.mxu0 0
      %219 = vmatprep.subr.bf16.mxu0 0
      %220 = vmatpush1.bf16.msra.mxu0 0
      %221 = vmatprep.subr.bf16.mxu0 0
      %222 = vmatpush1.bf16.msra.mxu0 0
      %223 = vmatprep.subr.bf16.mxu0 0
      %224 = vmatpush1.bf16.msra.mxu0 0
      %225 = vmatprep.subr.bf16.mxu0 0
      %226 = vmatpush1.bf16.msra.mxu0 0
      %227 = vmatprep.mubr.bf16.mxu0 0
      %228 = vmatmul.mubr.bf16.gmra.mrb[0].mxu0 %v193
      %v229 = vpop.f32.mrb[0].mxu0
      %v230 = vadd.f32 0.0, %v229
      %v231 = vpop.f32.mrb[0].mxu0
      %v232 = vpop.f32.mrb[0].mxu0
      %v233 = vpop.f32.mrb[0].mxu0
      %234 = vdwg.mxu0
      %v238 = vsel %vm191, %v172, 0
      %240 = vmatprep.subr.bf16.mxu0 0
      %241 = vmatpush1.bf16.msra.mxu0 %v183
      %242 = vmatprep.subr.bf16.mxu0 0
      %243 = vmatpush1.bf16.msra.mxu0 %v184
      %244 = vmatprep.subr.bf16.mxu0 0
      %245 = vmatpush1.bf16.msra.mxu0 0
      %246 = vmatprep.subr.bf16.mxu0 0
      %247 = vmatpush1.bf16.msra.mxu0 0
      %248 = vmatprep.subr.bf16.mxu0 0
      %249 = vmatpush1.bf16.msra.mxu0 0
      %250 = vmatprep.subr.bf16.mxu0 0
      %251 = vmatpush1.bf16.msra.mxu0 0
      %252 = vmatprep.subr.bf16.mxu0 0
      %253 = vmatpush1.bf16.msra.mxu0 0
      %254 = vmatprep.subr.bf16.mxu0 0
      %255 = vmatpush1.bf16.msra.mxu0 0
      %256 = vmatprep.subr.bf16.mxu0 0
      %257 = vmatpush1.bf16.msra.mxu0 0
      %258 = vmatprep.subr.bf16.mxu0 0
      %259 = vmatpush1.bf16.msra.mxu0 0
      %260 = vmatprep.subr.bf16.mxu0 0
      %261 = vmatpush1.bf16.msra.mxu0 0
      %262 = vmatprep.subr.bf16.mxu0 0
      %263 = vmatpush1.bf16.msra.mxu0 0
      %264 = vmatprep.subr.bf16.mxu0 0
      %265 = vmatpush1.bf16.msra.mxu0 0
      %266 = vmatprep.subr.bf16.mxu0 0
      %267 = vmatpush1.bf16.msra.mxu0 0
      %268 = vmatprep.subr.bf16.mxu0 0
      %269 = vmatpush1.bf16.msra.mxu0 0
      %270 = vmatprep.subr.bf16.mxu0 0
      %271 = vmatpush1.bf16.msra.mxu0 0
      %272 = vmatprep.mubr.bf16.mxu0 0
      %273 = vmatmul.mubr.bf16.gmra.mrb[0].mxu0 %v238
      %v274 = vpop.f32.mrb[0].mxu0
      %v275 = vadd.f32 %v230, %v274
      %v276 = vpop.f32.mrb[0].mxu0
      %v277 = vpop.f32.mrb[0].mxu0
      %v278 = vpop.f32.mrb[0].mxu0
      %279 = vdwg.mxu0
      %s280 = scalar_lea.vmem %s0, 2
      %v281 = vld [vmem:[%s280] sm:$0x1]
      %282 = vrot.lane.b32.xlu0 %v183, 126
      %v283 = vpop.permute.xlu0 %282
      %284 = vrot.lane.b32.xlu0 %v184, 126
      %v285 = vpop.permute.xlu0 %284
      %v289 = vsel %vm191, %v281, 0
      %291 = vmatprep.subr.bf16.mxu0 0
      %292 = vmatpush1.bf16.msra.mxu0 %v283
      %293 = vmatprep.subr.bf16.mxu0 0
      %294 = vmatpush1.bf16.msra.mxu0 %v285
      %295 = vmatprep.subr.bf16.mxu0 0
      %296 = vmatpush1.bf16.msra.mxu0 0
      %297 = vmatprep.subr.bf16.mxu0 0
      %298 = vmatpush1.bf16.msra.mxu0 0
      %299 = vmatprep.subr.bf16.mxu0 0
      %300 = vmatpush1.bf16.msra.mxu0 0
      %301 = vmatprep.subr.bf16.mxu0 0
      %302 = vmatpush1.bf16.msra.mxu0 0
      %303 = vmatprep.subr.bf16.mxu0 0
      %304 = vmatpush1.bf16.msra.mxu0 0
      %305 = vmatprep.subr.bf16.mxu0 0
      %306 = vmatpush1.bf16.msra.mxu0 0
      %307 = vmatprep.subr.bf16.mxu0 0
      %308 = vmatpush1.bf16.msra.mxu0 0
      %309 = vmatprep.subr.bf16.mxu0 0
      %310 = vmatpush1.bf16.msra.mxu0 0
      %311 = vmatprep.subr.bf16.mxu0 0
      %312 = vmatpush1.bf16.msra.mxu0 0
      %313 = vmatprep.subr.bf16.mxu0 0
      %314 = vmatpush1.bf16.msra.mxu0 0
      %315 = vmatprep.subr.bf16.mxu0 0
      %316 = vmatpush1.bf16.msra.mxu0 0
      %317 = vmatprep.subr.bf16.mxu0 0
      %318 = vmatpush1.bf16.msra.mxu0 0
      %319 = vmatprep.subr.bf16.mxu0 0
      %320 = vmatpush1.bf16.msra.mxu0 0
      %321 = vmatprep.subr.bf16.mxu0 0
      %322 = vmatpush1.bf16.msra.mxu0 0
      %323 = vmatprep.mubr.bf16.mxu0 0
      %324 = vmatmul.mubr.bf16.gmra.mrb[0].mxu0 %v289
      %v325 = vpop.f32.mrb[0].mxu0
      %v326 = vadd.f32 0.0, %v325
      %v327 = vpop.f32.mrb[0].mxu0
      %v328 = vpop.f32.mrb[0].mxu0
      %v329 = vpop.f32.mrb[0].mxu0
      %330 = vdwg.mxu0
      %v331 = vadd.f32 %v275, %v326
      %s332 = scalar_lea.vmem %s0, 3
      %v333 = vld [vmem:[%s332] sm:$0x1]
      %334 = vrot.lane.b32.xlu0 %v183, 122
      %v335 = vpop.permute.xlu0 %334
      %336 = vrot.lane.b32.xlu0 %v184, 122
      %v337 = vpop.permute.xlu0 %336
      %v341 = vsel %vm191, %v333, 0
      %343 = vmatprep.subr.bf16.mxu0 0
      %344 = vmatpush1.bf16.msra.mxu0 %v335
      %345 = vmatprep.subr.bf16.mxu0 0
      %346 = vmatpush1.bf16.msra.mxu0 %v337
      %347 = vmatprep.subr.bf16.mxu0 0
      %348 = vmatpush1.bf16.msra.mxu0 0
      %349 = vmatprep.subr.bf16.mxu0 0
      %350 = vmatpush1.bf16.msra.mxu0 0
      %351 = vmatprep.subr.bf16.mxu0 0
      %352 = vmatpush1.bf16.msra.mxu0 0
      %353 = vmatprep.subr.bf16.mxu0 0
      %354 = vmatpush1.bf16.msra.mxu0 0
      %355 = vmatprep.subr.bf16.mxu0 0
      %356 = vmatpush1.bf16.msra.mxu0 0
      %357 = vmatprep.subr.bf16.mxu0 0
      %358 = vmatpush1.bf16.msra.mxu0 0
      %359 = vmatprep.subr.bf16.mxu0 0
      %360 = vmatpush1.bf16.msra.mxu0 0
      %361 = vmatprep.subr.bf16.mxu0 0
      %362 = vmatpush1.bf16.msra.mxu0 0
      %363 = vmatprep.subr.bf16.mxu0 0
      %364 = vmatpush1.bf16.msra.mxu0 0
      %365 = vmatprep.subr.bf16.mxu0 0
      %366 = vmatpush1.bf16.msra.mxu0 0
      %367 = vmatprep.subr.bf16.mxu0 0
      %368 = vmatpush1.bf16.msra.mxu0 0
      %369 = vmatprep.subr.bf16.mxu0 0
      %370 = vmatpush1.bf16.msra.mxu0 0
      %371 = vmatprep.subr.bf16.mxu0 0
      %372 = vmatpush1.bf16.msra.mxu0 0
      %373 = vmatprep.subr.bf16.mxu0 0
      %374 = vmatpush1.bf16.msra.mxu0 0
      %375 = vmatprep.mubr.bf16.mxu0 0
      %376 = vmatmul.mubr.bf16.gmra.mrb[0].mxu0 %v341
      %v377 = vpop.f32.mrb[0].mxu0
      %v378 = vadd.f32 0.0, %v377
      %v379 = vpop.f32.mrb[0].mxu0
      %v380 = vpop.f32.mrb[0].mxu0
      %v381 = vpop.f32.mrb[0].mxu0
      %382 = vdwg.mxu0
      %v383 = vadd.f32 %v331, %v378
      %s384 = scalar_lea.vmem %s0, 4
      %v385 = vld [vmem:[%s384] sm:$0x1]
      %386 = vrot.lane.b32.xlu0 %v183, 121
      %v387 = vpop.permute.xlu0 %386
      %388 = vrot.lane.b32.xlu0 %v184, 121
      %v389 = vpop.permute.xlu0 %388
      %v393 = vsel %vm191, %v385, 0
      %395 = vmatprep.subr.bf16.mxu0 0
      %396 = vmatpush1.bf16.msra.mxu0 %v387
      %397 = vmatprep.subr.bf16.mxu0 0
      %398 = vmatpush1.bf16.msra.mxu0 %v389
      %399 = vmatprep.subr.bf16.mxu0 0
      %400 = vmatpush1.bf16.msra.mxu0 0
      %401 = vmatprep.subr.bf16.mxu0 0
      %402 = vmatpush1.bf16.msra.mxu0 0
      %403 = vmatprep.subr.bf16.mxu0 0
      %404 = vmatpush1.bf16.msra.mxu0 0
      %405 = vmatprep.subr.bf16.mxu0 0
      %406 = vmatpush1.bf16.msra.mxu0 0
      %407 = vmatprep.subr.bf16.mxu0 0
      %408 = vmatpush1.bf16.msra.mxu0 0
      %409 = vmatprep.subr.bf16.mxu0 0
      %410 = vmatpush1.bf16.msra.mxu0 0
      %411 = vmatprep.subr.bf16.mxu0 0
      %412 = vmatpush1.bf16.msra.mxu0 0
      %413 = vmatprep.subr.bf16.mxu0 0
      %414 = vmatpush1.bf16.msra.mxu0 0
      %415 = vmatprep.subr.bf16.mxu0 0
      %416 = vmatpush1.bf16.msra.mxu0 0
      %417 = vmatprep.subr.bf16.mxu0 0
      %418 = vmatpush1.bf16.msra.mxu0 0
      %419 = vmatprep.subr.bf16.mxu0 0
      %420 = vmatpush1.bf16.msra.mxu0 0
      %421 = vmatprep.subr.bf16.mxu0 0
      %422 = vmatpush1.bf16.msra.mxu0 0
      %423 = vmatprep.subr.bf16.mxu0 0
      %424 = vmatpush1.bf16.msra.mxu0 0
      %425 = vmatprep.subr.bf16.mxu0 0
      %426 = vmatpush1.bf16.msra.mxu0 0
      %427 = vmatprep.mubr.bf16.mxu0 0
      %428 = vmatmul.mubr.bf16.gmra.mrb[0].mxu0 %v393
      %v429 = vpop.f32.mrb[0].mxu0
      %v430 = vadd.f32 0.0, %v429
      %v431 = vpop.f32.mrb[0].mxu0
      %v432 = vpop.f32.mrb[0].mxu0
      %v433 = vpop.f32.mrb[0].mxu0
      %434 = vdwg.mxu0
      %v435 = vadd.f32 %v383, %v430
      %s436 = scalar_lea.vmem %s0, 5
      %v437 = vld [vmem:[%s436] sm:$0x1]
      %438 = vrot.lane.b32.xlu0 %v183, 120
      %v439 = vpop.permute.xlu0 %438
      %440 = vrot.lane.b32.xlu0 %v184, 120
      %v441 = vpop.permute.xlu0 %440
      %v445 = vsel %vm191, %v437, 0
      %447 = vmatprep.subr.bf16.mxu0 0
      %448 = vmatpush1.bf16.msra.mxu0 %v439
      %449 = vmatprep.subr.bf16.mxu0 0
      %450 = vmatpush1.bf16.msra.mxu0 %v441
      %451 = vmatprep.subr.bf16.mxu0 0
      %452 = vmatpush1.bf16.msra.mxu0 0
      %453 = vmatprep.subr.bf16.mxu0 0
      %454 = vmatpush1.bf16.msra.mxu0 0
      %455 = vmatprep.subr.bf16.mxu0 0
      %456 = vmatpush1.bf16.msra.mxu0 0
      %457 = vmatprep.subr.bf16.mxu0 0
      %458 = vmatpush1.bf16.msra.mxu0 0
      %459 = vmatprep.subr.bf16.mxu0 0
      %460 = vmatpush1.bf16.msra.mxu0 0
      %461 = vmatprep.subr.bf16.mxu0 0
      %462 = vmatpush1.bf16.msra.mxu0 0
      %463 = vmatprep.subr.bf16.mxu0 0
      %464 = vmatpush1.bf16.msra.mxu0 0
      %465 = vmatprep.subr.bf16.mxu0 0
      %466 = vmatpush1.bf16.msra.mxu0 0
      %467 = vmatprep.subr.bf16.mxu0 0
      %468 = vmatpush1.bf16.msra.mxu0 0
      %469 = vmatprep.subr.bf16.mxu0 0
      %470 = vmatpush1.bf16.msra.mxu0 0
      %471 = vmatprep.subr.bf16.mxu0 0
      %472 = vmatpush1.bf16.msra.mxu0 0
      %473 = vmatprep.subr.bf16.mxu0 0
      %474 = vmatpush1.bf16.msra.mxu0 0
      %475 = vmatprep.subr.bf16.mxu0 0
      %476 = vmatpush1.bf16.msra.mxu0 0
      %477 = vmatprep.subr.bf16.mxu0 0
      %478 = vmatpush1.bf16.msra.mxu0 0
      %479 = vmatprep.mubr.bf16.mxu0 0
      %480 = vmatmul.mubr.bf16.gmra.mrb[0].mxu0 %v445
      %v481 = vpop.f32.mrb[0].mxu0
      %v482 = vadd.f32 0.0, %v481
      %v483 = vpop.f32.mrb[0].mxu0
      %v484 = vpop.f32.mrb[0].mxu0
      %v485 = vpop.f32.mrb[0].mxu0
      %486 = vdwg.mxu0
      %v487 = vadd.f32 %v435, %v482
      %s488 = scalar_lea.vmem %s0, 6
      %v489 = vld [vmem:[%s488] sm:$0x1]
      %490 = vrot.lane.b32.xlu0 %v183, 116
      %v491 = vpop.permute.xlu0 %490
      %492 = vrot.lane.b32.xlu0 %v184, 116
      %v493 = vpop.permute.xlu0 %492
      %v497 = vsel %vm191, %v489, 0
      %499 = vmatprep.subr.bf16.mxu0 0
      %500 = vmatpush1.bf16.msra.mxu0 %v491
      %501 = vmatprep.subr.bf16.mxu0 0
      %502 = vmatpush1.bf16.msra.mxu0 %v493
      %503 = vmatprep.subr.bf16.mxu0 0
      %504 = vmatpush1.bf16.msra.mxu0 0
      %505 = vmatprep.subr.bf16.mxu0 0
      %506 = vmatpush1.bf16.msra.mxu0 0
      %507 = vmatprep.subr.bf16.mxu0 0
      %508 = vmatpush1.bf16.msra.mxu0 0
      %509 = vmatprep.subr.bf16.mxu0 0
      %510 = vmatpush1.bf16.msra.mxu0 0
      %511 = vmatprep.subr.bf16.mxu0 0
      %512 = vmatpush1.bf16.msra.mxu0 0
      %513 = vmatprep.subr.bf16.mxu0 0
      %514 = vmatpush1.bf16.msra.mxu0 0
      %515 = vmatprep.subr.bf16.mxu0 0
      %516 = vmatpush1.bf16.msra.mxu0 0
      %517 = vmatprep.subr.bf16.mxu0 0
      %518 = vmatpush1.bf16.msra.mxu0 0
      %519 = vmatprep.subr.bf16.mxu0 0
      %520 = vmatpush1.bf16.msra.mxu0 0
      %521 = vmatprep.subr.bf16.mxu0 0
      %522 = vmatpush1.bf16.msra.mxu0 0
      %523 = vmatprep.subr.bf16.mxu0 0
      %524 = vmatpush1.bf16.msra.mxu0 0
      %525 = vmatprep.subr.bf16.mxu0 0
      %526 = vmatpush1.bf16.msra.mxu0 0
      %527 = vmatprep.subr.bf16.mxu0 0
      %528 = vmatpush1.bf16.msra.mxu0 0
      %529 = vmatprep.subr.bf16.mxu0 0
      %530 = vmatpush1.bf16.msra.mxu0 0
      %531 = vmatprep.mubr.bf16.mxu0 0
      %532 = vmatmul.mubr.bf16.gmra.mrb[0].mxu0 %v497
      %v533 = vpop.f32.mrb[0].mxu0
      %v534 = vadd.f32 0.0, %v533
      %v535 = vpop.f32.mrb[0].mxu0
      %v536 = vpop.f32.mrb[0].mxu0
      %v537 = vpop.f32.mrb[0].mxu0
      %538 = vdwg.mxu0
      %v539 = vadd.f32 %v487, %v534
      %s540 = scalar_lea.vmem %s0, 7
      %v541 = vld [vmem:[%s540] sm:$0x1]
      %542 = vrot.lane.b32.xlu0 %v183, 115
      %v543 = vpop.permute.xlu0 %542
      %544 = vrot.lane.b32.xlu0 %v184, 115
      %v545 = vpop.permute.xlu0 %544
      %v549 = vsel %vm191, %v541, 0
      %551 = vmatprep.subr.bf16.mxu0 0
      %552 = vmatpush1.bf16.msra.mxu0 %v543
      %553 = vmatprep.subr.bf16.mxu0 0
      %554 = vmatpush1.bf16.msra.mxu0 %v545
      %555 = vmatprep.subr.bf16.mxu0 0
      %556 = vmatpush1.bf16.msra.mxu0 0
      %557 = vmatprep.subr.bf16.mxu0 0
      %558 = vmatpush1.bf16.msra.mxu0 0
      %559 = vmatprep.subr.bf16.mxu0 0
      %560 = vmatpush1.bf16.msra.mxu0 0
      %561 = vmatprep.subr.bf16.mxu0 0
      %562 = vmatpush1.bf16.msra.mxu0 0
      %563 = vmatprep.subr.bf16.mxu0 0
      %564 = vmatpush1.bf16.msra.mxu0 0
      %565 = vmatprep.subr.bf16.mxu0 0
      %566 = vmatpush1.bf16.msra.mxu0 0
      %567 = vmatprep.subr.bf16.mxu0 0
      %568 = vmatpush1.bf16.msra.mxu0 0
      %569 = vmatprep.subr.bf16.mxu0 0
      %570 = vmatpush1.bf16.msra.mxu0 0
      %571 = vmatprep.subr.bf16.mxu0 0
      %572 = vmatpush1.bf16.msra.mxu0 0
      %573 = vmatprep.subr.bf16.mxu0 0
      %574 = vmatpush1.bf16.msra.mxu0 0
      %575 = vmatprep.subr.bf16.mxu0 0
      %576 = vmatpush1.bf16.msra.mxu0 0
      %577 = vmatprep.subr.bf16.mxu0 0
      %578 = vmatpush1.bf16.msra.mxu0 0
      %579 = vmatprep.subr.bf16.mxu0 0
      %580 = vmatpush1.bf16.msra.mxu0 0
      %581 = vmatprep.subr.bf16.mxu0 0
      %582 = vmatpush1.bf16.msra.mxu0 0
      %583 = vmatprep.mubr.bf16.mxu0 0
      %584 = vmatmul.mubr.bf16.gmra.mrb[0].mxu0 %v549
      %v585 = vpop.f32.mrb[0].mxu0
      %v586 = vadd.f32 0.0, %v585
      %v587 = vpop.f32.mrb[0].mxu0
      %v588 = vpop.f32.mrb[0].mxu0
      %v589 = vpop.f32.mrb[0].mxu0
      %590 = vdwg.mxu0
      %v591 = vadd.f32 %v539, %v586
      %s592 = scalar_lea.vmem %s0, 8
      %v593 = vld [vmem:[%s592] sm:$0x1]
      %594 = vrot.lane.b32.xlu0 %v183, 114
      %v595 = vpop.permute.xlu0 %594
      %596 = vrot.lane.b32.xlu0 %v184, 114
      %v597 = vpop.permute.xlu0 %596
      %v601 = vsel %vm191, %v593, 0
      %603 = vmatprep.subr.bf16.mxu0 0
      %604 = vmatpush1.bf16.msra.mxu0 %v595
      %605 = vmatprep.subr.bf16.mxu0 0
      %606 = vmatpush1.bf16.msra.mxu0 %v597
      %607 = vmatprep.subr.bf16.mxu0 0
      %608 = vmatpush1.bf16.msra.mxu0 0
      %609 = vmatprep.subr.bf16.mxu0 0
      %610 = vmatpush1.bf16.msra.mxu0 0
      %611 = vmatprep.subr.bf16.mxu0 0
      %612 = vmatpush1.bf16.msra.mxu0 0
      %613 = vmatprep.subr.bf16.mxu0 0
      %614 = vmatpush1.bf16.msra.mxu0 0
      %615 = vmatprep.subr.bf16.mxu0 0
      %616 = vmatpush1.bf16.msra.mxu0 0
      %617 = vmatprep.subr.bf16.mxu0 0
      %618 = vmatpush1.bf16.msra.mxu0 0
      %619 = vmatprep.subr.bf16.mxu0 0
      %620 = vmatpush1.bf16.msra.mxu0 0
      %621 = vmatprep.subr.bf16.mxu0 0
      %622 = vmatpush1.bf16.msra.mxu0 0
      %623 = vmatprep.subr.bf16.mxu0 0
      %624 = vmatpush1.bf16.msra.mxu0 0
      %625 = vmatprep.subr.bf16.mxu0 0
      %626 = vmatpush1.bf16.msra.mxu0 0
      %627 = vmatprep.subr.bf16.mxu0 0
      %628 = vmatpush1.bf16.msra.mxu0 0
      %629 = vmatprep.subr.bf16.mxu0 0
      %630 = vmatpush1.bf16.msra.mxu0 0
      %631 = vmatprep.subr.bf16.mxu0 0
      %632 = vmatpush1.bf16.msra.mxu0 0
      %633 = vmatprep.subr.bf16.mxu0 0
      %634 = vmatpush1.bf16.msra.mxu0 0
      %635 = vmatprep.mubr.bf16.mxu0 0
      %636 = vmatmul.mubr.bf16.gmra.mrb[0].mxu0 %v601
      %v637 = vpop.f32.mrb[0].mxu0
      %v638 = vadd.f32 0.0, %v637
      %v639 = vpop.f32.mrb[0].mxu0
      %v640 = vpop.f32.mrb[0].mxu0
      %v641 = vpop.f32.mrb[0].mxu0
      %642 = vdwg.mxu0
      %v643 = vadd.f32 %v591, %v638
      %v644 = vld [vmem:[%s2] sm:$0x3]
      %646 = vset.pattern.permute.xlu0 0
      %647 = vperm.xlu0 %646, %v644
      %v648 = vpop.permute.xlu0 %647
      %v650 = vadd.f32 %v643, %v648
      %v651 = vpack.c.bf16 %v650, %v650
      %vm652 = vcmask 188416
      %653 = vst.msk [vmem:[%s166] sm:$0x1] %vm652, %v651
      %p654 = scmp.lt.s32.totalorder %s14, 1
      %s655 = scalar_select %p654, %s14, 1
      %s656 = scalar_lea.vmem %s3, %s655
      // Predicated region
      $region33: #{lapirn_forward.7} parent=31 // pred_check
        %p657 = pneg %p100
      $region34: #{lapirn_forward.7} parent=31 // pred_check_branch
        %659 = sbr.rel (%p657) target = $region36
      $region35: #{lapirn_forward.7} parent=31 // pred_region
        _
      $region36: #{lapirn_forward.7} parent=31 // pred_fallthru
        _
    $region32: #{lapirn_forward.7} parent=5 // pred_fallthru
      _
    %p660 = scmp.le.s32.totalorder 2, %s9
    // Predicated region
    $region37: #{lapirn_forward.7} parent=5 // pred_check
      %p661 = pneg %p660
    $region38: #{lapirn_forward.7} parent=5 // pred_check_branch
      %663 = sbr.rel (%p661) target = $region40
    $region39: #{lapirn_forward.7} parent=5 // pred_region
      %s664 = ssub.s32 %s9, 2
      // Predicated region
      $region41: #{lapirn_forward.7} parent=39 // pred_check
        %p665 = pneg %p106
      $region42: #{lapirn_forward.7} parent=39 // pred_check_branch
        %667 = sbr.rel (%p665) target = $region44
      $region43: #{lapirn_forward.7} parent=39 // pred_region
        %p668 = scmp.lt.s32.totalorder %s15, 1
        %s669 = scalar_select %p668, %s15, 1
        %s670 = scalar_lea.vmem %s3, %s669
      $region44: #{lapirn_forward.7} parent=39 // pred_fallthru
        _
    $region40: #{lapirn_forward.7} parent=5 // pred_fallthru
      _
  $region6: #{lapirn_forward.7} parent=0 // loop_footer
    %s13 = sadd.s32 1, %s9
  $region7: #{lapirn_forward.7} parent=0 // loop_footer_branch
    %8 = sbr.rel target = $region3
  $region8: #{lapirn_forward.7} parent=0 // loop_exit
    _

</llo_original>
